<compile_context>
chip_gen: v7x
topology: tpu7x:2x2x1
jax: 0.10.0
libtpu: 0.0.40
codegen_flags: <defaults>
</compile_context>

<pallas_src>
import functools

import jax
import jax.numpy as jnp
from jax.experimental import pallas as pl
from jax.experimental.pallas import tpu as pltpu


def _round_up(x, m):
    return (x + m - 1) // m * m


def _pick_tile_o(o_pad):
    """Per-generation O-column tile: 512 on v7x (64 MiB VMEM), up to 1024 on v5e/v6e."""
    try:
        vmem_bytes = pltpu.get_tpu_info().vmem_capacity_bytes
    except Exception:
        vmem_bytes = 64 << 20          # conservative (v7x) fallback
    target = 1024 if vmem_bytes >= (96 << 20) else 512
    for cand in (target, 512, 256, 128):
        if cand <= o_pad and o_pad % cand == 0:
            return cand
    return o_pad


def _decoder_step_kernel(ids_ref,                       # (Bp,)   i32  SMEM (scalar prefetch)
                         emb_hbm,                       # (V, Ep) f32  HBM (pl.ANY)
                         h0_ref, c0_ref,                # (Bp, Hp) f32 VMEM (resident)
                         w_ih_ref, w_hh_ref,            # (Ep,4Hp)/(Hp,4Hp) bf16 (resident)
                         b_g_ref,                       # (1, 4Hp) f32 (resident)
                         w_out_ref, b_out_ref,          # (Hp, To) bf16 / (1, To) f32 streamed
                         pred_ref,                      # (Bp, To) f32 output tile
                         hout_ref, cout_ref,            # (Bp, Hp) f32 outputs
                         x_scr,                         # (Bp, Ep) f32 scratch (gathered emb)
                         h_scr,                         # (Bp, Hp) bf16 scratch (new hidden)
                         gather_sem):                   # (Bp,) DMA semaphores
    j = pl.program_id(0)

    # The LSTM cell update runs once (first O tile); later grid steps reuse h_scr.
    @pl.when(j == 0)
    def _lstm_step():
        b_pad = x_scr.shape[0]
        h_pad = h_scr.shape[1]

        # Embedding lookup as a DMA row gather: only Bp rows move HBM -> VMEM.
        copies = []
        for b in range(b_pad):
            cp = pltpu.make_async_copy(
                emb_hbm.at[pl.ds(ids_ref[b], 1), :],
                x_scr.at[pl.ds(b, 1), :],
                gather_sem.at[b])
            cp.start()
            copies.append(cp)
        for cp in copies:
            cp.wait()

        x = x_scr[...].astype(jnp.bfloat16)              # (Bp, Ep)
        h = h0_ref[...]                                  # (Bp, Hp) f32
        c = c0_ref[...]

        # Two bf16 dots accumulated in f32 (no (Bp, Ep+Hp) concat materialization).
        gates = (jnp.dot(x, w_ih_ref[...], preferred_element_type=jnp.float32)
                 + jnp.dot(h.astype(jnp.bfloat16), w_hh_ref[...],
                           preferred_element_type=jnp.float32)
                 + b_g_ref[...])                         # (Bp, 4*Hp) f32

        # PyTorch LSTM gate order i, f, g, o; Hp is a multiple of 128 so every slice
        # below is a whole lane tile (no relayout).
        i_g = jax.nn.sigmoid(gates[:, 0 * h_pad:1 * h_pad])
        f_g = jax.nn.sigmoid(gates[:, 1 * h_pad:2 * h_pad])
        g_g = jnp.tanh(gates[:, 2 * h_pad:3 * h_pad])
        o_g = jax.nn.sigmoid(gates[:, 3 * h_pad:4 * h_pad])

        c_new = f_g * c + i_g * g_g                      # f32 state update
        h_new = o_g * jnp.tanh(c_new)

        hout_ref[...] = h_new.astype(hout_ref.dtype)
        cout_ref[...] = c_new.astype(cout_ref.dtype)
        h_scr[...] = h_new.astype(h_scr.dtype)           # bf16 copy for the projection

    # Output projection for this O tile: (Bp, Hp) @ (Hp, To) + bias, lane-dense store.
    pred_ref[...] = (jnp.dot(h_scr[...], w_out_ref[...],
                             preferred_element_type=jnp.float32)
                     + b_out_ref[...]).astype(pred_ref.dtype)


@functools.partial(jax.jit, static_argnames=("out_dim",))
def _decoder_rnn_forward_impl(inputs, last_hidden, last_cell, packed, out_dim):
    emb = packed["embedding"]            # (V, Ep)    f32  (HBM, row-gathered)
    w_ih = packed["w_ih"]                # (Ep, 4*Hp) bf16
    w_hh = packed["w_hh"]                # (Hp, 4*Hp) bf16
    b_g = packed["b_gates"]              # (1, 4*Hp)  f32
    w_out = packed["w_out"]              # (Hp, Op)   bf16
    b_out = packed["b_out"]              # (1, Op)    f32

    B = inputs.shape[0]
    H = last_hidden.shape[-1]
    Ep = w_ih.shape[0]
    Hp = w_hh.shape[0]
    Op = w_out.shape[1]
    Bp = _round_up(B, 8)                 # full 8-sublane vregs / MXU rows

    # TODO(synk): for multi-token decode keep ids/h/c in this padded layout across steps.
    ids = jnp.pad(inputs.astype(jnp.int32), (0, Bp - B))
    h0 = jnp.pad(last_hidden[0].astype(jnp.float32), ((0, Bp - B), (0, Hp - H)))
    c0 = jnp.pad(last_cell[0].astype(jnp.float32), ((0, Bp - B), (0, Hp - H)))

    tile_o = _pick_tile_o(Op)
    grid = (Op // tile_o,)

    # VMEM budget: resident gate weights/state + double-buffered streamed O tiles.
    resident = (w_ih.size * 2 + w_hh.size * 2 + b_g.size * 4
                + 4 * (Bp * Hp * 4)                      # h0, c0, hout, cout
                + Bp * Ep * 4 + Bp * Hp * 2)             # x / h scratch
    streamed = 2 * (Hp * tile_o * 2 + tile_o * 4 + Bp * tile_o * 4)
    vmem_limit = int(min(max(resident + streamed + (4 << 20), 16 << 20), 64 << 20))

    flops = 2 * Bp * (Ep + Hp) * (4 * Hp) + 2 * Bp * Hp * Op
    bytes_accessed = (Bp * Ep * 4 + w_ih.size * 2 + w_hh.size * 2 + b_g.size * 4
                      + w_out.size * 2 + b_out.size * 4
                      + 4 * Bp * Hp * 4 + Bp * Op * 4)

    const_map = lambda j, ids_ref: (0, 0)
    o_tile_map = lambda j, ids_ref: (0, j)

    pred_p, h_p, c_p = pl.pallas_call(
        _decoder_step_kernel,
        out_shape=(
            jax.ShapeDtypeStruct((Bp, Op), jnp.float32),   # lane-dense pred slab
            jax.ShapeDtypeStruct((Bp, Hp), jnp.float32),
            jax.ShapeDtypeStruct((Bp, Hp), jnp.float32),
        ),
        grid_spec=pltpu.PrefetchScalarGridSpec(
            num_scalar_prefetch=1,
            grid=grid,
            in_specs=[
                pl.BlockSpec(memory_space=pl.ANY),          # embedding stays in HBM
                pl.BlockSpec((Bp, Hp), const_map),          # h0 (resident)
                pl.BlockSpec((Bp, Hp), const_map),          # c0 (resident)
                pl.BlockSpec((Ep, 4 * Hp), const_map),      # W_ih (resident)
                pl.BlockSpec((Hp, 4 * Hp), const_map),      # W_hh (resident)
                pl.BlockSpec((1, 4 * Hp), const_map),       # gate bias (resident)
                pl.BlockSpec((Hp, tile_o), o_tile_map),     # streamed W_out tile
                pl.BlockSpec((1, tile_o), o_tile_map),      # streamed b_out tile
            ],
            out_specs=(
                pl.BlockSpec((Bp, tile_o), o_tile_map),     # pred tile
                pl.BlockSpec((Bp, Hp), const_map),          # new hidden
                pl.BlockSpec((Bp, Hp), const_map),          # new cell
            ),
            scratch_shapes=[
                pltpu.VMEM((Bp, Ep), jnp.float32),          # gathered embedding rows
                pltpu.VMEM((Bp, Hp), jnp.bfloat16),         # h_new for the projection
                pltpu.SemaphoreType.DMA((Bp,)),
            ]),
        compiler_params=pltpu.CompilerParams(
            # The j==0 LSTM step must precede the projection tiles -> "arbitrary".
            # TODO(synk): to split O across v7x's two TensorCores, broadcast/recompute
            # h_new per core (core_map) instead of relying on shared scratch.
            dimension_semantics=("arbitrary",),
            vmem_limit_bytes=vmem_limit),
        cost_estimate=pl.CostEstimate(
            flops=flops, transcendentals=5 * Bp * Hp, bytes_accessed=bytes_accessed),
    )(ids, emb, h0, c0, w_ih, w_hh, b_g, w_out, b_out)

    pred = pred_p[:B, :out_dim]
    hidden = h_p[:B, :H][None]
    cell = c_p[:B, :H][None]
    return pred, hidden, cell


def decoder_rnn_forward(inputs, last_hidden, last_cell, packed, out_dim):
    """Pallas-backed equivalent of DecoderRNN.forward (single step, n_layer == 1)."""
    return _decoder_rnn_forward_impl(inputs, last_hidden, last_cell, packed, out_dim)


def make_params(key, vocab_size, embedding_dim, rnn_dim, out_dim):
    """Deterministic synthetic f32 params (PyTorch-equivalent, stored pre-transposed)."""
    ks = jax.random.split(key, 7)
    scale = 0.1
    emb = scale * jax.random.normal(ks[0], (vocab_size, embedding_dim), jnp.float32)
    # PyTorch: weight_ih_l0 (4H, E), weight_hh_l0 (4H, H) -> store transposed [in, 4H].
    w_ih_t = scale * jax.random.normal(ks[1], (embedding_dim, 4 * rnn_dim), jnp.float32)
    w_hh_t = scale * jax.random.normal(ks[2], (rnn_dim, 4 * rnn_dim), jnp.float32)
    b_ih = scale * jax.random.normal(ks[3], (4 * rnn_dim,), jnp.float32)
    b_hh = scale * jax.random.normal(ks[4], (4 * rnn_dim,), jnp.float32)
    # PyTorch: out.weight (O, H) -> store transposed.
    w_out_t = scale * jax.random.normal(ks[5], (rnn_dim, out_dim), jnp.float32)
    b_out = scale * jax.random.normal(ks[6], (out_dim,), jnp.float32)
    return {
        "embedding": emb,
        "w_ih_t": w_ih_t,
        "w_hh_t": w_hh_t,
        "b_gates": (b_ih + b_hh)[None, :],   # (1, 4H)
        "w_out_t": w_out_t,
        "b_out": b_out[None, :],             # (1, O)
    }


def pack_params(params):
    """Pad / bf16-pack the raw f32 params into the kernel layout.

    Gate g of W_ih / W_hh lives in columns [g*Hp, g*Hp + H); padded rows/cols are zero,
    so padded lanes never contaminate the real outputs (padded h/c stay exactly 0).
    The embedding table keeps f32 precision and is only lane-padded (rows are DMA-gathered).
    """
    V, E = params["embedding"].shape
    H = params["w_hh_t"].shape[0]
    O = params["w_out_t"].shape[1]
    Ep, Hp, Op = _round_up(E, 128), _round_up(H, 128), _round_up(O, 128)

    emb_p = jnp.zeros((V, Ep), jnp.float32).at[:, :E].set(params["embedding"])

    w_ih_p = jnp.zeros((Ep, 4 * Hp), jnp.float32)
    w_hh_p = jnp.zeros((Hp, 4 * Hp), jnp.float32)
    b_g_p = jnp.zeros((1, 4 * Hp), jnp.float32)
    for g in range(4):
        w_ih_p = w_ih_p.at[:E, g * Hp:g * Hp + H].set(params["w_ih_t"][:, g * H:(g + 1) * H])
        w_hh_p = w_hh_p.at[:H, g * Hp:g * Hp + H].set(params["w_hh_t"][:, g * H:(g + 1) * H])
        b_g_p = b_g_p.at[:, g * Hp:g * Hp + H].set(params["b_gates"][:, g * H:(g + 1) * H])

    w_out_p = jnp.zeros((Hp, Op), jnp.float32).at[:H, :O].set(params["w_out_t"])
    b_out_p = jnp.zeros((1, Op), jnp.float32).at[:, :O].set(params["b_out"])

    return {
        "embedding": emb_p,                        # f32 HBM row-gather source
        "w_ih": w_ih_p.astype(jnp.bfloat16),
        "w_hh": w_hh_p.astype(jnp.bfloat16),
        "b_gates": b_g_p,
        "w_out": w_out_p.astype(jnp.bfloat16),
        "b_out": b_out_p,
    }


def _reference_forward(inputs, last_hidden, last_cell, params):
    """Pure-JAX f32 reference (same math as torch LSTM step + Linear)."""
    emb = jnp.take(params["embedding"], inputs, axis=0)
    h, c = last_hidden[0], last_cell[0]
    gates = emb @ params["w_ih_t"] + h @ params["w_hh_t"] + params["b_gates"]
    H = h.shape[-1]
    i = jax.nn.sigmoid(gates[:, :H])
    f = jax.nn.sigmoid(gates[:, H:2 * H])
    g = jnp.tanh(gates[:, 2 * H:3 * H])
    o = jax.nn.sigmoid(gates[:, 3 * H:])
    c_new = f * c + i * g
    h_new = o * jnp.tanh(c_new)
    pred = h_new @ params["w_out_t"] + params["b_out"]
    return pred, h_new[None], c_new[None]


if __name__ == "__main__":
    vocab_size = 50
    embedding_dim = 16
    rnn_dim = 32
    out_dim = 24
    batch = 4
    n_layer = 1

    key = jax.random.PRNGKey(0)
    k_param, k_in, k_h, k_c = jax.random.split(key, 4)

    params = make_params(k_param, vocab_size, embedding_dim, rnn_dim, out_dim)
    packed = pack_params(params)

    inputs = jax.random.randint(k_in, (batch,), 0, vocab_size, dtype=jnp.int32)
    last_hidden = jax.random.normal(k_h, (n_layer, batch, rnn_dim), jnp.float32)
    last_cell = jax.random.normal(k_c, (n_layer, batch, rnn_dim), jnp.float32)

    pred, hidden, cell = decoder_rnn_forward(inputs, last_hidden, last_cell,
                                             packed, out_dim)
    jax.block_until_ready((pred, hidden, cell))

    # Correctness check against the pure-JAX f32 reference.  Weights in the kernel are
    # bf16 with f32 accumulation, so allow ~1e-3-scale error.
    pred_r, hidden_r, cell_r = _reference_forward(inputs, last_hidden, last_cell, params)
    assert pred.shape == (batch, out_dim)
    assert hidden.shape == (n_layer, batch, rnn_dim)
    assert cell.shape == (n_layer, batch, rnn_dim)
    assert jnp.allclose(pred, pred_r, atol=2e-2)
    assert jnp.allclose(hidden, hidden_r, atol=2e-2)
    assert jnp.allclose(cell, cell_r, atol=2e-2)

    print("KERNEL_OK")
</pallas_src>

<mosaic_0001>
module attributes {stable_mosaic.version = 11 : i64} {
  func.func @_decoder_step_kernel(%arg0: i32, %arg1: memref<8xi32, #tpu.memory_space<smem>>, %arg2: memref<50x128xf32, #tpu.memory_space<any>>, %arg3: memref<8x128xf32, #tpu.memory_space<vmem>>, %arg4: memref<8x128xf32, #tpu.memory_space<vmem>>, %arg5: memref<128x512xbf16, #tpu.memory_space<vmem>>, %arg6: memref<128x512xbf16, #tpu.memory_space<vmem>>, %arg7: memref<1x512xf32, #tpu.memory_space<vmem>>, %arg8: memref<128x128xbf16, #tpu.memory_space<vmem>>, %arg9: memref<1x128xf32, #tpu.memory_space<vmem>>, %arg10: memref<8x128xf32, #tpu.memory_space<vmem>>, %arg11: memref<8x128xf32, #tpu.memory_space<vmem>>, %arg12: memref<8x128xf32, #tpu.memory_space<vmem>>, %arg13: memref<8x128xf32, #tpu.memory_space<vmem>>, %arg14: memref<8x128xbf16, #tpu.memory_space<vmem>>, %arg15: memref<8x!tpu.dma_semaphore, #tpu.memory_space<semaphore_mem>>) attributes {dimension_semantics = [#tpu.dimension_semantics<arbitrary>], iteration_bounds = array<i64: 1>, scalar_prefetch = 1 : i64, scratch_operands = 3 : i64, tpu.core_type = #tpu.core_type<tc>, window_params = [{}, {pipeline_mode = #tpu.pipeline_mode<synchronous>, transform_indices = @transform_1, window_bounds = array<i64: 8, 128>}, {pipeline_mode = #tpu.pipeline_mode<synchronous>, transform_indices = @transform_2, window_bounds = array<i64: 8, 128>}, {pipeline_mode = #tpu.pipeline_mode<synchronous>, transform_indices = @transform_3, window_bounds = array<i64: 128, 512>}, {pipeline_mode = #tpu.pipeline_mode<synchronous>, transform_indices = @transform_4, window_bounds = array<i64: 128, 512>}, {pipeline_mode = #tpu.pipeline_mode<synchronous>, transform_indices = @transform_5, window_bounds = array<i64: 1, 512>}, {transform_indices = @transform_6, window_bounds = array<i64: 128, 128>}, {transform_indices = @transform_7, window_bounds = array<i64: 1, 128>}, {transform_indices = @transform_8, window_bounds = array<i64: 8, 128>}, {pipeline_mode = #tpu.pipeline_mode<synchronous>, transform_indices = @transform_9, window_bounds = array<i64: 8, 128>}, {pipeline_mode = #tpu.pipeline_mode<synchronous>, transform_indices = @transform_10, window_bounds = array<i64: 8, 128>}]} {
    %c0_i32 = arith.constant 0 : i32
    %0 = arith.cmpi eq, %arg0, %c0_i32 : i32
    %1 = arith.extui %0 : i1 to i32
    %c0_i32_0 = arith.constant 0 : i32
    %2 = arith.cmpi ne, %1, %c0_i32_0 : i32
    scf.if %2 {
      %c0_8 = arith.constant 0 : index
      %10 = memref.load %arg1[%c0_8] : memref<8xi32, #tpu.memory_space<smem>>
      %c0_i32_9 = arith.constant 0 : i32
      %c0_i32_10 = arith.constant 0 : i32
      %11 = tpu.memref_slice %arg2[%10, %c0_i32_10] : memref<50x128xf32, #tpu.memory_space<any>> -> memref<1x128xf32, #tpu.memory_space<any>>
      %c0_i32_11 = arith.constant 0 : i32
      %c0_i32_12 = arith.constant 0 : i32
      %12 = tpu.memref_slice %arg13[%c0_i32_11, %c0_i32_12] : memref<8x128xf32, #tpu.memory_space<vmem>> -> memref<1x128xf32, #tpu.memory_space<vmem>>
      %13 = tpu.memref_slice %arg15[%c0_i32_9] : memref<8x!tpu.dma_semaphore, #tpu.memory_space<semaphore_mem>> -> memref<1x!tpu.dma_semaphore, #tpu.memory_space<semaphore_mem>>
      %14 = tpu.memref_squeeze %13 : memref<1x!tpu.dma_semaphore, #tpu.memory_space<semaphore_mem>> -> memref<!tpu.dma_semaphore, #tpu.memory_space<semaphore_mem>>
      tpu.enqueue_dma source(%11 : memref<1x128xf32, #tpu.memory_space<any>>) target(%12 : memref<1x128xf32, #tpu.memory_space<vmem>>) target_semaphore(%14 : memref<!tpu.dma_semaphore, #tpu.memory_space<semaphore_mem>>)
      %c1 = arith.constant 1 : index
      %15 = memref.load %arg1[%c1] : memref<8xi32, #tpu.memory_space<smem>>
      %c1_i32 = arith.constant 1 : i32
      %c0_i32_13 = arith.constant 0 : i32
      %16 = tpu.memref_slice %arg2[%15, %c0_i32_13] : memref<50x128xf32, #tpu.memory_space<any>> -> memref<1x128xf32, #tpu.memory_space<any>>
      %c1_i32_14 = arith.constant 1 : i32
      %c0_i32_15 = arith.constant 0 : i32
      %17 = tpu.memref_slice %arg13[%c1_i32_14, %c0_i32_15] : memref<8x128xf32, #tpu.memory_space<vmem>> -> memref<1x128xf32, #tpu.memory_space<vmem>>
      %18 = tpu.memref_slice %arg15[%c1_i32] : memref<8x!tpu.dma_semaphore, #tpu.memory_space<semaphore_mem>> -> memref<1x!tpu.dma_semaphore, #tpu.memory_space<semaphore_mem>>
      %19 = tpu.memref_squeeze %18 : memref<1x!tpu.dma_semaphore, #tpu.memory_space<semaphore_mem>> -> memref<!tpu.dma_semaphore, #tpu.memory_space<semaphore_mem>>
      tpu.enqueue_dma source(%16 : memref<1x128xf32, #tpu.memory_space<any>>) target(%17 : memref<1x128xf32, #tpu.memory_space<vmem>>) target_semaphore(%19 : memref<!tpu.dma_semaphore, #tpu.memory_space<semaphore_mem>>)
      %c2 = arith.constant 2 : index
      %20 = memref.load %arg1[%c2] : memref<8xi32, #tpu.memory_space<smem>>
      %c2_i32 = arith.constant 2 : i32
      %c0_i32_16 = arith.constant 0 : i32
      %21 = tpu.memref_slice %arg2[%20, %c0_i32_16] : memref<50x128xf32, #tpu.memory_space<any>> -> memref<1x128xf32, #tpu.memory_space<any>>
      %c2_i32_17 = arith.constant 2 : i32
      %c0_i32_18 = arith.constant 0 : i32
      %22 = tpu.memref_slice %arg13[%c2_i32_17, %c0_i32_18] : memref<8x128xf32, #tpu.memory_space<vmem>> -> memref<1x128xf32, #tpu.memory_space<vmem>>
      %23 = tpu.memref_slice %arg15[%c2_i32] : memref<8x!tpu.dma_semaphore, #tpu.memory_space<semaphore_mem>> -> memref<1x!tpu.dma_semaphore, #tpu.memory_space<semaphore_mem>>
      %24 = tpu.memref_squeeze %23 : memref<1x!tpu.dma_semaphore, #tpu.memory_space<semaphore_mem>> -> memref<!tpu.dma_semaphore, #tpu.memory_space<semaphore_mem>>
      tpu.enqueue_dma source(%21 : memref<1x128xf32, #tpu.memory_space<any>>) target(%22 : memref<1x128xf32, #tpu.memory_space<vmem>>) target_semaphore(%24 : memref<!tpu.dma_semaphore, #tpu.memory_space<semaphore_mem>>)
      %c3 = arith.constant 3 : index
      %25 = memref.load %arg1[%c3] : memref<8xi32, #tpu.memory_space<smem>>
      %c3_i32 = arith.constant 3 : i32
      %c0_i32_19 = arith.constant 0 : i32
      %26 = tpu.memref_slice %arg2[%25, %c0_i32_19] : memref<50x128xf32, #tpu.memory_space<any>> -> memref<1x128xf32, #tpu.memory_space<any>>
      %c3_i32_20 = arith.constant 3 : i32
      %c0_i32_21 = arith.constant 0 : i32
      %27 = tpu.memref_slice %arg13[%c3_i32_20, %c0_i32_21] : memref<8x128xf32, #tpu.memory_space<vmem>> -> memref<1x128xf32, #tpu.memory_space<vmem>>
      %28 = tpu.memref_slice %arg15[%c3_i32] : memref<8x!tpu.dma_semaphore, #tpu.memory_space<semaphore_mem>> -> memref<1x!tpu.dma_semaphore, #tpu.memory_space<semaphore_mem>>
      %29 = tpu.memref_squeeze %28 : memref<1x!tpu.dma_semaphore, #tpu.memory_space<semaphore_mem>> -> memref<!tpu.dma_semaphore, #tpu.memory_space<semaphore_mem>>
      tpu.enqueue_dma source(%26 : memref<1x128xf32, #tpu.memory_space<any>>) target(%27 : memref<1x128xf32, #tpu.memory_space<vmem>>) target_semaphore(%29 : memref<!tpu.dma_semaphore, #tpu.memory_space<semaphore_mem>>)
      %c4 = arith.constant 4 : index
      %30 = memref.load %arg1[%c4] : memref<8xi32, #tpu.memory_space<smem>>
      %c4_i32 = arith.constant 4 : i32
      %c0_i32_22 = arith.constant 0 : i32
      %31 = tpu.memref_slice %arg2[%30, %c0_i32_22] : memref<50x128xf32, #tpu.memory_space<any>> -> memref<1x128xf32, #tpu.memory_space<any>>
      %c4_i32_23 = arith.constant 4 : i32
      %c0_i32_24 = arith.constant 0 : i32
      %32 = tpu.memref_slice %arg13[%c4_i32_23, %c0_i32_24] : memref<8x128xf32, #tpu.memory_space<vmem>> -> memref<1x128xf32, #tpu.memory_space<vmem>>
      %33 = tpu.memref_slice %arg15[%c4_i32] : memref<8x!tpu.dma_semaphore, #tpu.memory_space<semaphore_mem>> -> memref<1x!tpu.dma_semaphore, #tpu.memory_space<semaphore_mem>>
      %34 = tpu.memref_squeeze %33 : memref<1x!tpu.dma_semaphore, #tpu.memory_space<semaphore_mem>> -> memref<!tpu.dma_semaphore, #tpu.memory_space<semaphore_mem>>
      tpu.enqueue_dma source(%31 : memref<1x128xf32, #tpu.memory_space<any>>) target(%32 : memref<1x128xf32, #tpu.memory_space<vmem>>) target_semaphore(%34 : memref<!tpu.dma_semaphore, #tpu.memory_space<semaphore_mem>>)
      %c5 = arith.constant 5 : index
      %35 = memref.load %arg1[%c5] : memref<8xi32, #tpu.memory_space<smem>>
      %c5_i32 = arith.constant 5 : i32
      %c0_i32_25 = arith.constant 0 : i32
      %36 = tpu.memref_slice %arg2[%35, %c0_i32_25] : memref<50x128xf32, #tpu.memory_space<any>> -> memref<1x128xf32, #tpu.memory_space<any>>
      %c5_i32_26 = arith.constant 5 : i32
      %c0_i32_27 = arith.constant 0 : i32
      %37 = tpu.memref_slice %arg13[%c5_i32_26, %c0_i32_27] : memref<8x128xf32, #tpu.memory_space<vmem>> -> memref<1x128xf32, #tpu.memory_space<vmem>>
      %38 = tpu.memref_slice %arg15[%c5_i32] : memref<8x!tpu.dma_semaphore, #tpu.memory_space<semaphore_mem>> -> memref<1x!tpu.dma_semaphore, #tpu.memory_space<semaphore_mem>>
      %39 = tpu.memref_squeeze %38 : memref<1x!tpu.dma_semaphore, #tpu.memory_space<semaphore_mem>> -> memref<!tpu.dma_semaphore, #tpu.memory_space<semaphore_mem>>
      tpu.enqueue_dma source(%36 : memref<1x128xf32, #tpu.memory_space<any>>) target(%37 : memref<1x128xf32, #tpu.memory_space<vmem>>) target_semaphore(%39 : memref<!tpu.dma_semaphore, #tpu.memory_space<semaphore_mem>>)
      %c6 = arith.constant 6 : index
      %40 = memref.load %arg1[%c6] : memref<8xi32, #tpu.memory_space<smem>>
      %c6_i32 = arith.constant 6 : i32
      %c0_i32_28 = arith.constant 0 : i32
      %41 = tpu.memref_slice %arg2[%40, %c0_i32_28] : memref<50x128xf32, #tpu.memory_space<any>> -> memref<1x128xf32, #tpu.memory_space<any>>
      %c6_i32_29 = arith.constant 6 : i32
      %c0_i32_30 = arith.constant 0 : i32
      %42 = tpu.memref_slice %arg13[%c6_i32_29, %c0_i32_30] : memref<8x128xf32, #tpu.memory_space<vmem>> -> memref<1x128xf32, #tpu.memory_space<vmem>>
      %43 = tpu.memref_slice %arg15[%c6_i32] : memref<8x!tpu.dma_semaphore, #tpu.memory_space<semaphore_mem>> -> memref<1x!tpu.dma_semaphore, #tpu.memory_space<semaphore_mem>>
      %44 = tpu.memref_squeeze %43 : memref<1x!tpu.dma_semaphore, #tpu.memory_space<semaphore_mem>> -> memref<!tpu.dma_semaphore, #tpu.memory_space<semaphore_mem>>
      tpu.enqueue_dma source(%41 : memref<1x128xf32, #tpu.memory_space<any>>) target(%42 : memref<1x128xf32, #tpu.memory_space<vmem>>) target_semaphore(%44 : memref<!tpu.dma_semaphore, #tpu.memory_space<semaphore_mem>>)
      %c7 = arith.constant 7 : index
      %45 = memref.load %arg1[%c7] : memref<8xi32, #tpu.memory_space<smem>>
      %c7_i32 = arith.constant 7 : i32
      %c0_i32_31 = arith.constant 0 : i32
      %46 = tpu.memref_slice %arg2[%45, %c0_i32_31] : memref<50x128xf32, #tpu.memory_space<any>> -> memref<1x128xf32, #tpu.memory_space<any>>
      %c7_i32_32 = arith.constant 7 : i32
      %c0_i32_33 = arith.constant 0 : i32
      %47 = tpu.memref_slice %arg13[%c7_i32_32, %c0_i32_33] : memref<8x128xf32, #tpu.memory_space<vmem>> -> memref<1x128xf32, #tpu.memory_space<vmem>>
      %48 = tpu.memref_slice %arg15[%c7_i32] : memref<8x!tpu.dma_semaphore, #tpu.memory_space<semaphore_mem>> -> memref<1x!tpu.dma_semaphore, #tpu.memory_space<semaphore_mem>>
      %49 = tpu.memref_squeeze %48 : memref<1x!tpu.dma_semaphore, #tpu.memory_space<semaphore_mem>> -> memref<!tpu.dma_semaphore, #tpu.memory_space<semaphore_mem>>
      tpu.enqueue_dma source(%46 : memref<1x128xf32, #tpu.memory_space<any>>) target(%47 : memref<1x128xf32, #tpu.memory_space<vmem>>) target_semaphore(%49 : memref<!tpu.dma_semaphore, #tpu.memory_space<semaphore_mem>>)
      %c0_i32_34 = arith.constant 0 : i32
      %c0_i32_35 = arith.constant 0 : i32
      %50 = tpu.memref_slice %arg2[%10, %c0_i32_35] : memref<50x128xf32, #tpu.memory_space<any>> -> memref<1x128xf32, #tpu.memory_space<any>>
      %c0_i32_36 = arith.constant 0 : i32
      %c0_i32_37 = arith.constant 0 : i32
      %51 = tpu.memref_slice %arg13[%c0_i32_36, %c0_i32_37] : memref<8x128xf32, #tpu.memory_space<vmem>> -> memref<1x128xf32, #tpu.memory_space<vmem>>
      %52 = tpu.memref_slice %arg15[%c0_i32_34] : memref<8x!tpu.dma_semaphore, #tpu.memory_space<semaphore_mem>> -> memref<1x!tpu.dma_semaphore, #tpu.memory_space<semaphore_mem>>
      %53 = tpu.memref_squeeze %52 : memref<1x!tpu.dma_semaphore, #tpu.memory_space<semaphore_mem>> -> memref<!tpu.dma_semaphore, #tpu.memory_space<semaphore_mem>>
      tpu.wait_dma2 semaphore(%53 : memref<!tpu.dma_semaphore, #tpu.memory_space<semaphore_mem>>) src(%50 : memref<1x128xf32, #tpu.memory_space<any>>) dst(%51 : memref<1x128xf32, #tpu.memory_space<vmem>>)
      %c1_i32_38 = arith.constant 1 : i32
      %c0_i32_39 = arith.constant 0 : i32
      %54 = tpu.memref_slice %arg2[%15, %c0_i32_39] : memref<50x128xf32, #tpu.memory_space<any>> -> memref<1x128xf32, #tpu.memory_space<any>>
      %c1_i32_40 = arith.constant 1 : i32
      %c0_i32_41 = arith.constant 0 : i32
      %55 = tpu.memref_slice %arg13[%c1_i32_40, %c0_i32_41] : memref<8x128xf32, #tpu.memory_space<vmem>> -> memref<1x128xf32, #tpu.memory_space<vmem>>
      %56 = tpu.memref_slice %arg15[%c1_i32_38] : memref<8x!tpu.dma_semaphore, #tpu.memory_space<semaphore_mem>> -> memref<1x!tpu.dma_semaphore, #tpu.memory_space<semaphore_mem>>
      %57 = tpu.memref_squeeze %56 : memref<1x!tpu.dma_semaphore, #tpu.memory_space<semaphore_mem>> -> memref<!tpu.dma_semaphore, #tpu.memory_space<semaphore_mem>>
      tpu.wait_dma2 semaphore(%57 : memref<!tpu.dma_semaphore, #tpu.memory_space<semaphore_mem>>) src(%54 : memref<1x128xf32, #tpu.memory_space<any>>) dst(%55 : memref<1x128xf32, #tpu.memory_space<vmem>>)
      %c2_i32_42 = arith.constant 2 : i32
      %c0_i32_43 = arith.constant 0 : i32
      %58 = tpu.memref_slice %arg2[%20, %c0_i32_43] : memref<50x128xf32, #tpu.memory_space<any>> -> memref<1x128xf32, #tpu.memory_space<any>>
      %c2_i32_44 = arith.constant 2 : i32
      %c0_i32_45 = arith.constant 0 : i32
      %59 = tpu.memref_slice %arg13[%c2_i32_44, %c0_i32_45] : memref<8x128xf32, #tpu.memory_space<vmem>> -> memref<1x128xf32, #tpu.memory_space<vmem>>
      %60 = tpu.memref_slice %arg15[%c2_i32_42] : memref<8x!tpu.dma_semaphore, #tpu.memory_space<semaphore_mem>> -> memref<1x!tpu.dma_semaphore, #tpu.memory_space<semaphore_mem>>
      %61 = tpu.memref_squeeze %60 : memref<1x!tpu.dma_semaphore, #tpu.memory_space<semaphore_mem>> -> memref<!tpu.dma_semaphore, #tpu.memory_space<semaphore_mem>>
      tpu.wait_dma2 semaphore(%61 : memref<!tpu.dma_semaphore, #tpu.memory_space<semaphore_mem>>) src(%58 : memref<1x128xf32, #tpu.memory_space<any>>) dst(%59 : memref<1x128xf32, #tpu.memory_space<vmem>>)
      %c3_i32_46 = arith.constant 3 : i32
      %c0_i32_47 = arith.constant 0 : i32
      %62 = tpu.memref_slice %arg2[%25, %c0_i32_47] : memref<50x128xf32, #tpu.memory_space<any>> -> memref<1x128xf32, #tpu.memory_space<any>>
      %c3_i32_48 = arith.constant 3 : i32
      %c0_i32_49 = arith.constant 0 : i32
      %63 = tpu.memref_slice %arg13[%c3_i32_48, %c0_i32_49] : memref<8x128xf32, #tpu.memory_space<vmem>> -> memref<1x128xf32, #tpu.memory_space<vmem>>
      %64 = tpu.memref_slice %arg15[%c3_i32_46] : memref<8x!tpu.dma_semaphore, #tpu.memory_space<semaphore_mem>> -> memref<1x!tpu.dma_semaphore, #tpu.memory_space<semaphore_mem>>
      %65 = tpu.memref_squeeze %64 : memref<1x!tpu.dma_semaphore, #tpu.memory_space<semaphore_mem>> -> memref<!tpu.dma_semaphore, #tpu.memory_space<semaphore_mem>>
      tpu.wait_dma2 semaphore(%65 : memref<!tpu.dma_semaphore, #tpu.memory_space<semaphore_mem>>) src(%62 : memref<1x128xf32, #tpu.memory_space<any>>) dst(%63 : memref<1x128xf32, #tpu.memory_space<vmem>>)
      %c4_i32_50 = arith.constant 4 : i32
      %c0_i32_51 = arith.constant 0 : i32
      %66 = tpu.memref_slice %arg2[%30, %c0_i32_51] : memref<50x128xf32, #tpu.memory_space<any>> -> memref<1x128xf32, #tpu.memory_space<any>>
      %c4_i32_52 = arith.constant 4 : i32
      %c0_i32_53 = arith.constant 0 : i32
      %67 = tpu.memref_slice %arg13[%c4_i32_52, %c0_i32_53] : memref<8x128xf32, #tpu.memory_space<vmem>> -> memref<1x128xf32, #tpu.memory_space<vmem>>
      %68 = tpu.memref_slice %arg15[%c4_i32_50] : memref<8x!tpu.dma_semaphore, #tpu.memory_space<semaphore_mem>> -> memref<1x!tpu.dma_semaphore, #tpu.memory_space<semaphore_mem>>
      %69 = tpu.memref_squeeze %68 : memref<1x!tpu.dma_semaphore, #tpu.memory_space<semaphore_mem>> -> memref<!tpu.dma_semaphore, #tpu.memory_space<semaphore_mem>>
      tpu.wait_dma2 semaphore(%69 : memref<!tpu.dma_semaphore, #tpu.memory_space<semaphore_mem>>) src(%66 : memref<1x128xf32, #tpu.memory_space<any>>) dst(%67 : memref<1x128xf32, #tpu.memory_space<vmem>>)
      %c5_i32_54 = arith.constant 5 : i32
      %c0_i32_55 = arith.constant 0 : i32
      %70 = tpu.memref_slice %arg2[%35, %c0_i32_55] : memref<50x128xf32, #tpu.memory_space<any>> -> memref<1x128xf32, #tpu.memory_space<any>>
      %c5_i32_56 = arith.constant 5 : i32
      %c0_i32_57 = arith.constant 0 : i32
      %71 = tpu.memref_slice %arg13[%c5_i32_56, %c0_i32_57] : memref<8x128xf32, #tpu.memory_space<vmem>> -> memref<1x128xf32, #tpu.memory_space<vmem>>
      %72 = tpu.memref_slice %arg15[%c5_i32_54] : memref<8x!tpu.dma_semaphore, #tpu.memory_space<semaphore_mem>> -> memref<1x!tpu.dma_semaphore, #tpu.memory_space<semaphore_mem>>
      %73 = tpu.memref_squeeze %72 : memref<1x!tpu.dma_semaphore, #tpu.memory_space<semaphore_mem>> -> memref<!tpu.dma_semaphore, #tpu.memory_space<semaphore_mem>>
      tpu.wait_dma2 semaphore(%73 : memref<!tpu.dma_semaphore, #tpu.memory_space<semaphore_mem>>) src(%70 : memref<1x128xf32, #tpu.memory_space<any>>) dst(%71 : memref<1x128xf32, #tpu.memory_space<vmem>>)
      %c6_i32_58 = arith.constant 6 : i32
      %c0_i32_59 = arith.constant 0 : i32
      %74 = tpu.memref_slice %arg2[%40, %c0_i32_59] : memref<50x128xf32, #tpu.memory_space<any>> -> memref<1x128xf32, #tpu.memory_space<any>>
      %c6_i32_60 = arith.constant 6 : i32
      %c0_i32_61 = arith.constant 0 : i32
      %75 = tpu.memref_slice %arg13[%c6_i32_60, %c0_i32_61] : memref<8x128xf32, #tpu.memory_space<vmem>> -> memref<1x128xf32, #tpu.memory_space<vmem>>
      %76 = tpu.memref_slice %arg15[%c6_i32_58] : memref<8x!tpu.dma_semaphore, #tpu.memory_space<semaphore_mem>> -> memref<1x!tpu.dma_semaphore, #tpu.memory_space<semaphore_mem>>
      %77 = tpu.memref_squeeze %76 : memref<1x!tpu.dma_semaphore, #tpu.memory_space<semaphore_mem>> -> memref<!tpu.dma_semaphore, #tpu.memory_space<semaphore_mem>>
      tpu.wait_dma2 semaphore(%77 : memref<!tpu.dma_semaphore, #tpu.memory_space<semaphore_mem>>) src(%74 : memref<1x128xf32, #tpu.memory_space<any>>) dst(%75 : memref<1x128xf32, #tpu.memory_space<vmem>>)
      %c7_i32_62 = arith.constant 7 : i32
      %c0_i32_63 = arith.constant 0 : i32
      %78 = tpu.memref_slice %arg2[%45, %c0_i32_63] : memref<50x128xf32, #tpu.memory_space<any>> -> memref<1x128xf32, #tpu.memory_space<any>>
      %c7_i32_64 = arith.constant 7 : i32
      %c0_i32_65 = arith.constant 0 : i32
      %79 = tpu.memref_slice %arg13[%c7_i32_64, %c0_i32_65] : memref<8x128xf32, #tpu.memory_space<vmem>> -> memref<1x128xf32, #tpu.memory_space<vmem>>
      %80 = tpu.memref_slice %arg15[%c7_i32_62] : memref<8x!tpu.dma_semaphore, #tpu.memory_space<semaphore_mem>> -> memref<1x!tpu.dma_semaphore, #tpu.memory_space<semaphore_mem>>
      %81 = tpu.memref_squeeze %80 : memref<1x!tpu.dma_semaphore, #tpu.memory_space<semaphore_mem>> -> memref<!tpu.dma_semaphore, #tpu.memory_space<semaphore_mem>>
      tpu.wait_dma2 semaphore(%81 : memref<!tpu.dma_semaphore, #tpu.memory_space<semaphore_mem>>) src(%78 : memref<1x128xf32, #tpu.memory_space<any>>) dst(%79 : memref<1x128xf32, #tpu.memory_space<vmem>>)
      %c0_66 = arith.constant 0 : index
      %c0_67 = arith.constant 0 : index
      %82 = vector.load %arg13[%c0_66, %c0_67] : memref<8x128xf32, #tpu.memory_space<vmem>>, vector<8x128xf32>
      %83 = arith.truncf %82 : vector<8x128xf32> to vector<8x128xbf16>
      %c0_68 = arith.constant 0 : index
      %c0_69 = arith.constant 0 : index
      %84 = vector.load %arg3[%c0_68, %c0_69] : memref<8x128xf32, #tpu.memory_space<vmem>>, vector<8x128xf32>
      %c0_70 = arith.constant 0 : index
      %c0_71 = arith.constant 0 : index
      %85 = vector.load %arg4[%c0_70, %c0_71] : memref<8x128xf32, #tpu.memory_space<vmem>>, vector<8x128xf32>
      %c0_72 = arith.constant 0 : index
      %c0_73 = arith.constant 0 : index
      %86 = vector.load %arg5[%c0_72, %c0_73] : memref<128x512xbf16, #tpu.memory_space<vmem>>, vector<128x512xbf16>
      %cst_74 = arith.constant dense<0.000000e+00> : vector<8x512xf32>
      %87 = tpu.matmul %83, %86, %cst_74 {dimension_numbers = #tpu.dot_dimension_numbers<[1], [0], [0], [1], [0, 0, 1, 1], [], []>} : vector<8x128xbf16>, vector<128x512xbf16>, vector<8x512xf32> -> vector<8x512xf32>
      %88 = arith.truncf %84 : vector<8x128xf32> to vector<8x128xbf16>
      %c0_75 = arith.constant 0 : index
      %c0_76 = arith.constant 0 : index
      %89 = vector.load %arg6[%c0_75, %c0_76] : memref<128x512xbf16, #tpu.memory_space<vmem>>, vector<128x512xbf16>
      %cst_77 = arith.constant dense<0.000000e+00> : vector<8x512xf32>
      %90 = tpu.matmul %88, %89, %cst_77 {dimension_numbers = #tpu.dot_dimension_numbers<[1], [0], [0], [1], [0, 0, 1, 1], [], []>} : vector<8x128xbf16>, vector<128x512xbf16>, vector<8x512xf32> -> vector<8x512xf32>
      %91 = arith.addf %87, %90 : vector<8x512xf32>
      %c0_78 = arith.constant 0 : index
      %c0_79 = arith.constant 0 : index
      %92 = vector.load %arg7[%c0_78, %c0_79] : memref<1x512xf32, #tpu.memory_space<vmem>>, vector<1x512xf32>
      %93 = vector.broadcast %92 : vector<1x512xf32> to vector<8x512xf32>
      %94 = arith.addf %91, %93 : vector<8x512xf32>
      %95 = vector.extract_strided_slice %94 {offsets = [0, 0], sizes = [8, 128], strides = [1, 1]} : vector<8x512xf32> to vector<8x128xf32>
      %96 = arith.negf %95 : vector<8x128xf32>
      %97 = math.exp %96 : vector<8x128xf32>
      %cst_80 = arith.constant 1.000000e+00 : f32
      %98 = vector.broadcast %cst_80 : f32 to vector<8x128xf32>
      %99 = arith.addf %98, %97 : vector<8x128xf32>
      %100 = arith.divf %98, %99 : vector<8x128xf32>
      %101 = vector.extract_strided_slice %94 {offsets = [0, 128], sizes = [8, 128], strides = [1, 1]} : vector<8x512xf32> to vector<8x128xf32>
      %102 = arith.negf %101 : vector<8x128xf32>
      %103 = math.exp %102 : vector<8x128xf32>
      %cst_81 = arith.constant 1.000000e+00 : f32
      %104 = vector.broadcast %cst_81 : f32 to vector<8x128xf32>
      %105 = arith.addf %104, %103 : vector<8x128xf32>
      %106 = arith.divf %104, %105 : vector<8x128xf32>
      %107 = vector.extract_strided_slice %94 {offsets = [0, 256], sizes = [8, 128], strides = [1, 1]} : vector<8x512xf32> to vector<8x128xf32>
      %108 = math.tanh %107 : vector<8x128xf32>
      %109 = vector.extract_strided_slice %94 {offsets = [0, 384], sizes = [8, 128], strides = [1, 1]} : vector<8x512xf32> to vector<8x128xf32>
      %110 = arith.negf %109 : vector<8x128xf32>
      %111 = math.exp %110 : vector<8x128xf32>
      %cst_82 = arith.constant 1.000000e+00 : f32
      %112 = vector.broadcast %cst_82 : f32 to vector<8x128xf32>
      %113 = arith.addf %112, %111 : vector<8x128xf32>
      %114 = arith.divf %112, %113 : vector<8x128xf32>
      %115 = arith.mulf %106, %85 : vector<8x128xf32>
      %116 = arith.mulf %100, %108 : vector<8x128xf32>
      %117 = arith.addf %115, %116 : vector<8x128xf32>
      %118 = math.tanh %117 : vector<8x128xf32>
      %119 = arith.mulf %114, %118 : vector<8x128xf32>
      %c0_83 = arith.constant 0 : index
      %c0_84 = arith.constant 0 : index
      %120 = vector.load %arg11[%c0_83, %c0_84] : memref<8x128xf32, #tpu.memory_space<vmem>>, vector<8x128xf32>
      tpu.vector_store %arg11[%c0_83, %c0_84], %119 {strides = array<i32>} : memref<8x128xf32, #tpu.memory_space<vmem>>, vector<8x128xf32>,
      %c0_85 = arith.constant 0 : index
      %c0_86 = arith.constant 0 : index
      %121 = vector.load %arg12[%c0_85, %c0_86] : memref<8x128xf32, #tpu.memory_space<vmem>>, vector<8x128xf32>
      tpu.vector_store %arg12[%c0_85, %c0_86], %117 {strides = array<i32>} : memref<8x128xf32, #tpu.memory_space<vmem>>, vector<8x128xf32>,
      %122 = arith.truncf %119 : vector<8x128xf32> to vector<8x128xbf16>
      %c0_87 = arith.constant 0 : index
      %c0_88 = arith.constant 0 : index
      %123 = vector.load %arg14[%c0_87, %c0_88] : memref<8x128xbf16, #tpu.memory_space<vmem>>, vector<8x128xbf16>
      tpu.vector_store %arg14[%c0_87, %c0_88], %122 {strides = array<i32>} : memref<8x128xbf16, #tpu.memory_space<vmem>>, vector<8x128xbf16>,
    } else {
    }
    %c0 = arith.constant 0 : index
    %c0_1 = arith.constant 0 : index
    %3 = vector.load %arg14[%c0, %c0_1] : memref<8x128xbf16, #tpu.memory_space<vmem>>, vector<8x128xbf16>
    %c0_2 = arith.constant 0 : index
    %c0_3 = arith.constant 0 : index
    %4 = vector.load %arg8[%c0_2, %c0_3] : memref<128x128xbf16, #tpu.memory_space<vmem>>, vector<128x128xbf16>
    %cst = arith.constant dense<0.000000e+00> : vector<8x128xf32>
    %5 = tpu.matmul %3, %4, %cst {dimension_numbers = #tpu.dot_dimension_numbers<[1], [0], [0], [1], [0, 0, 1, 1], [], []>} : vector<8x128xbf16>, vector<128x128xbf16>, vector<8x128xf32> -> vector<8x128xf32>
    %c0_4 = arith.constant 0 : index
    %c0_5 = arith.constant 0 : index
    %6 = vector.load %arg9[%c0_4, %c0_5] : memref<1x128xf32, #tpu.memory_space<vmem>>, vector<1x128xf32>
    %7 = vector.broadcast %6 : vector<1x128xf32> to vector<8x128xf32>
    %8 = arith.addf %5, %7 : vector<8x128xf32>
    %c0_6 = arith.constant 0 : index
    %c0_7 = arith.constant 0 : index
    %9 = vector.load %arg10[%c0_6, %c0_7] : memref<8x128xf32, #tpu.memory_space<vmem>>, vector<8x128xf32>
    tpu.vector_store %arg10[%c0_6, %c0_7], %8 {strides = array<i32>} : memref<8x128xf32, #tpu.memory_space<vmem>>, vector<8x128xf32>,
    return
  }
  func.func @transform_1(%arg0: i32, %arg1: memref<8xi32, #tpu.memory_space<smem>>) -> (i32, i32) {
    %c0_i32 = arith.constant 0 : i32
    %c0_i32_0 = arith.constant 0 : i32
    %c0_i32_1 = arith.constant 0 : i32
    return %c0_i32, %c0_i32_0 : i32, i32
  }
  func.func @transform_2(%arg0: i32, %arg1: memref<8xi32, #tpu.memory_space<smem>>) -> (i32, i32) {
    %c0_i32 = arith.constant 0 : i32
    %c0_i32_0 = arith.constant 0 : i32
    %c0_i32_1 = arith.constant 0 : i32
    return %c0_i32, %c0_i32_0 : i32, i32
  }
  func.func @transform_3(%arg0: i32, %arg1: memref<8xi32, #tpu.memory_space<smem>>) -> (i32, i32) {
    %c0_i32 = arith.constant 0 : i32
    %c0_i32_0 = arith.constant 0 : i32
    %c0_i32_1 = arith.constant 0 : i32
    return %c0_i32, %c0_i32_0 : i32, i32
  }
  func.func @transform_4(%arg0: i32, %arg1: memref<8xi32, #tpu.memory_space<smem>>) -> (i32, i32) {
    %c0_i32 = arith.constant 0 : i32
    %c0_i32_0 = arith.constant 0 : i32
    %c0_i32_1 = arith.constant 0 : i32
    return %c0_i32, %c0_i32_0 : i32, i32
  }
  func.func @transform_5(%arg0: i32, %arg1: memref<8xi32, #tpu.memory_space<smem>>) -> (i32, i32) {
    %c0_i32 = arith.constant 0 : i32
    %c0_i32_0 = arith.constant 0 : i32
    %c0_i32_1 = arith.constant 0 : i32
    return %c0_i32, %c0_i32_0 : i32, i32
  }
  func.func @transform_6(%arg0: i32, %arg1: memref<8xi32, #tpu.memory_space<smem>>) -> (i32, i32) {
    %c0_i32 = arith.constant 0 : i32
    %c0_i32_0 = arith.constant 0 : i32
    return %c0_i32, %arg0 : i32, i32
  }
  func.func @transform_7(%arg0: i32, %arg1: memref<8xi32, #tpu.memory_space<smem>>) -> (i32, i32) {
    %c0_i32 = arith.constant 0 : i32
    %c0_i32_0 = arith.constant 0 : i32
    return %c0_i32, %arg0 : i32, i32
  }
  func.func @transform_8(%arg0: i32, %arg1: memref<8xi32, #tpu.memory_space<smem>>) -> (i32, i32) {
    %c0_i32 = arith.constant 0 : i32
    %c0_i32_0 = arith.constant 0 : i32
    return %c0_i32, %arg0 : i32, i32
  }
  func.func @transform_9(%arg0: i32, %arg1: memref<8xi32, #tpu.memory_space<smem>>) -> (i32, i32) {
    %c0_i32 = arith.constant 0 : i32
    %c0_i32_0 = arith.constant 0 : i32
    %c0_i32_1 = arith.constant 0 : i32
    return %c0_i32, %c0_i32_0 : i32, i32
  }
  func.func @transform_10(%arg0: i32, %arg1: memref<8xi32, #tpu.memory_space<smem>>) -> (i32, i32) {
    %c0_i32 = arith.constant 0 : i32
    %c0_i32_0 = arith.constant 0 : i32
    %c0_i32_1 = arith.constant 0 : i32
    return %c0_i32, %c0_i32_0 : i32, i32
  }
}

</mosaic_0001>

<llo_original>
// kernel: _decoder_rnn_forward_impl.1
$region0: #{_decoder_rnn_forward_impl.1}
  #allocation0 [shape = 'u32[]', space=smem, size = 0x4, offset = 0x4, fixed_abs, tag = 'smem constant byte address 0x4 - core index']
  #allocation1 [shape = 'u32[144,128]{1,0:T(1,128)}', space=vmem, size = 0x12000, scoped, tag = 'internal scratch']
  #allocation2 [shape = 'f32[8,128]{1,0:T(8,128)}', space=vmem, size = 0x1000, scoped, tag = 'scratch operand']
  #allocation3 [shape = 'bf16[8,128]{1,0:T(8,128)(2,1)}', space=vmem, size = 0x800, scoped, tag = 'scratch operand']
  #allocation4 [shape = 's32[8]{0}', space=sflag, size = 0x20, scoped, tag = 'scratch operand']
  #allocation5 [shape = 's32[1]{0}', space=sflag, size = 0x4, scoped, tag = 'scoped memory for _decoder_rnn_forward_impl.1']
  #allocation6 [shape = 'u8[512]{0}', space=smem, size = 0x200, scoped, tag = 'prefetched SMEM operand 0']
  #allocation12 [shape = 's32[]', space=sflag, size = 0x4, offset = 0, fixed_abs, tag = 'sflag constant byte address 0x0 - dummy sync flag']
  #allocation13 [shape = 's32[]', space=sflag, size = 0x4, offset = 0, fixed_abs, tag = 'sflag constant byte address 0x0 - dummy sync flag']
  #allocation14 [shape = 'u32[]', space=smem, size = 0x4, offset = 0x44, fixed_abs, tag = 'smem constant byte address 0x44 - assertion arg 0']
  #allocation15 [shape = 'u32[]', space=smem, size = 0x4, offset = 0x48, fixed_abs, tag = 'smem constant byte address 0x48 - assertion arg 1']
  #allocation16 [shape = 's32[]', space=sflag, size = 0x4, offset = 0, fixed_abs, tag = 'sflag constant byte address 0x0 - dummy sync flag']
  #allocation17 [shape = 's32[]', space=sflag, size = 0x4, offset = 0, fixed_abs, tag = 'sflag constant byte address 0x0 - dummy sync flag']
  #allocation18 [shape = 's32[]', space=sflag, size = 0x4, offset = 0, fixed_abs, tag = 'sflag constant byte address 0x0 - dummy sync flag']
  #allocation19 [shape = 's32[]', space=sflag, size = 0x4, offset = 0, fixed_abs, tag = 'sflag constant byte address 0x0 - dummy sync flag']
  #allocation20 [shape = 's32[]', space=sflag, size = 0x4, offset = 0, fixed_abs, tag = 'sflag constant byte address 0x0 - dummy sync flag']
  #allocation21 [shape = 's32[]', space=sflag, size = 0x4, offset = 0, fixed_abs, tag = 'sflag constant byte address 0x0 - dummy sync flag']
  #allocation22 [shape = 's32[]', space=sflag, size = 0x4, offset = 0, fixed_abs, tag = 'sflag constant byte address 0x0 - dummy sync flag']
  #allocation23 [shape = 's32[]', space=sflag, size = 0x4, offset = 0, fixed_abs, tag = 'sflag constant byte address 0x0 - dummy sync flag']
  #allocation24 [shape = 's32[]', space=sflag, size = 0x4, offset = 0, fixed_abs, tag = 'sflag constant byte address 0x0 - dummy sync flag']
  #allocation25 [shape = 's32[]', space=sflag, size = 0x4, offset = 0, fixed_abs, tag = 'sflag constant byte address 0x0 - dummy sync flag']
  #allocation26 [shape = 's32[]', space=sflag, size = 0x4, offset = 0, fixed_abs, tag = 'sflag constant byte address 0x0 - dummy sync flag']
  #allocation27 [shape = 's32[]', space=sflag, size = 0x4, offset = 0, fixed_abs, tag = 'sflag constant byte address 0x0 - dummy sync flag']
  #allocation28 [shape = 's32[]', space=sflag, size = 0x4, offset = 0, fixed_abs, tag = 'sflag constant byte address 0x0 - dummy sync flag']
  #allocation29 [shape = 's32[]', space=sflag, size = 0x4, offset = 0, fixed_abs, tag = 'sflag constant byte address 0x0 - dummy sync flag']
  %s0 = inlined_call_operand.vmem [shape: s32[8], index: 0, kind: input, shape index: {}]
  %s1 = inlined_call_operand.hbm [shape: f32[50,128], index: 1, kind: input, shape index: {}]
  %s2 = inlined_call_operand.vmem [shape: f32[8,128], index: 2, kind: input, shape index: {}]
  %s3 = inlined_call_operand.vmem [shape: f32[8,128], index: 3, kind: input, shape index: {}]
  %s4 = inlined_call_operand.hbm [shape: bf16[128,512], index: 4, kind: input, shape index: {}]
  %s5 = inlined_call_operand.hbm [shape: bf16[128,512], index: 5, kind: input, shape index: {}]
  %s6 = inlined_call_operand.hbm [shape: f32[1,512], index: 6, kind: input, shape index: {}]
  %s7 = inlined_call_operand.vmem [shape: bf16[128,128], index: 7, kind: input, shape index: {}]
  %s8 = inlined_call_operand.vmem [shape: f32[1,128], index: 8, kind: input, shape index: {}]
  %s9 = inlined_call_operand.vmem [shape: f32[8,128], index: 9, kind: output, shape index: {0}]
  %s10 = inlined_call_operand.vmem [shape: f32[8,128], index: 10, kind: output, shape index: {1}]
  %s11 = inlined_call_operand.vmem [shape: f32[8,128], index: 11, kind: output, shape index: {2}]
  %12 = xla_tuple %s9, %s10, %s11
  %s13 = sld [smem:[#allocation0]]
  $region102: #{_decoder_rnn_forward_impl.1} parent=0
    _
  %s15 = ssub.s32 1, %s13
  %s16 = scalar_select 0, %s15, %s13
  %s17 = sshll.u32 %s0, 4
  %s18 = int_to_ptr.vmem [resolvable:$true] %s17
  %20 = dma.vmem_to_smem %s18, 16, [#allocation6], [#allocation5]
  %21 = dma.done [#allocation5], 16
  %22 = sfence
  $region1: #{_decoder_rnn_forward_impl.1} parent=0
    #allocation7 [shape = 'u8[131072]{0}', space=vmem, size = 0x20000, scoped, tag = 'input window, operand 4, single buffered']
    #allocation8 [shape = 's32[1]{0}', space=sflag, size = 0x4, scoped, tag = 'scoped memory for _decoder_rnn_forward_impl.1']
    #allocation9 [shape = 'u8[131072]{0}', space=vmem, size = 0x20000, scoped, tag = 'input window, operand 5, single buffered']
    #allocation10 [shape = 's32[1]{0}', space=sflag, size = 0x4, scoped, tag = 'scoped memory for _decoder_rnn_forward_impl.1']
    #allocation11 [shape = 'u8[2048]{0}', space=vmem, size = 0x800, scoped, tag = 'input window, operand 6, single buffered']
    %23 = vsyncpa [#allocation8], 0
    %24 = vsyncpa [#allocation10], 0
    // Predicated region
    $region2: #{_decoder_rnn_forward_impl.1} parent=1 // pred_check
      _
    $region3: #{_decoder_rnn_forward_impl.1} parent=1 // pred_check_branch
      %26 = sbr.rel (0) target = $region5
    $region4: #{_decoder_rnn_forward_impl.1} parent=1 // pred_region
      _
    $region5: #{_decoder_rnn_forward_impl.1} parent=1 // pred_fallthru
      _
    // Predicated region
    $region6: #{_decoder_rnn_forward_impl.1} parent=1 // pred_check
      _
    $region7: #{_decoder_rnn_forward_impl.1} parent=1 // pred_check_branch
      %28 = sbr.rel (0) target = $region9
    $region8: #{_decoder_rnn_forward_impl.1} parent=1 // pred_region
      _
    $region9: #{_decoder_rnn_forward_impl.1} parent=1 // pred_fallthru
      _
    // Predicated region
    $region10: #{_decoder_rnn_forward_impl.1} parent=1 // pred_check
      _
    $region11: #{_decoder_rnn_forward_impl.1} parent=1 // pred_check_branch
      %30 = sbr.rel (0) target = $region13
    $region12: #{_decoder_rnn_forward_impl.1} parent=1 // pred_region
      %s32 = ssub.s32 4096, 4096
      %33 = vsyncadd [#allocation8], %s32
      %s34 = sshll.u32 [#allocation7], 4
      %s35 = int_to_ptr.vmem [resolvable:$true] %s34
      %40 = dma.hbm_to_vmem [thread:$0]  %s4, 4096, %s35, [#allocation8], 256, 256, 16
    $region13: #{_decoder_rnn_forward_impl.1} parent=1 // pred_fallthru
      _
    // Predicated region
    $region14: #{_decoder_rnn_forward_impl.1} parent=1 // pred_check
      _
    $region15: #{_decoder_rnn_forward_impl.1} parent=1 // pred_check_branch
      %42 = sbr.rel (0) target = $region17
    $region16: #{_decoder_rnn_forward_impl.1} parent=1 // pred_region
      %s44 = ssub.s32 4096, 4096
      %45 = vsyncadd [#allocation10], %s44
      %s46 = sshll.u32 [#allocation9], 4
      %s47 = int_to_ptr.vmem [resolvable:$true] %s46
      %52 = dma.hbm_to_vmem [thread:$0]  %s5, 4096, %s47, [#allocation10], 256, 256, 16
    $region17: #{_decoder_rnn_forward_impl.1} parent=1 // pred_fallthru
      _
    // Predicated region
    $region18: #{_decoder_rnn_forward_impl.1} parent=1 // pred_check
      _
    $region19: #{_decoder_rnn_forward_impl.1} parent=1 // pred_check_branch
      %54 = sbr.rel (0) target = $region21
    $region20: #{_decoder_rnn_forward_impl.1} parent=1 // pred_region
      %s56 = ssub.s32 64, 64
      %57 = vsyncadd [#allocation10], %s56
      %s59 = sshll.u32 [#allocation11], 4
      %s60 = int_to_ptr.vmem [resolvable:$true] %s59
      %62 = dma.hbm_to_vmem [thread:$0]  %s6, 64, %s60, [#allocation10]
    $region21: #{_decoder_rnn_forward_impl.1} parent=1 // pred_fallthru
      _
    // Predicated region
    $region22: #{_decoder_rnn_forward_impl.1} parent=1 // pred_check
      _
    $region23: #{_decoder_rnn_forward_impl.1} parent=1 // pred_check_branch
      %64 = sbr.rel (0) target = $region25
    $region24: #{_decoder_rnn_forward_impl.1} parent=1 // pred_region
      _
    $region25: #{_decoder_rnn_forward_impl.1} parent=1 // pred_fallthru
      _
    // Predicated region
    $region26: #{_decoder_rnn_forward_impl.1} parent=1 // pred_check
      _
    $region27: #{_decoder_rnn_forward_impl.1} parent=1 // pred_check_branch
      %66 = sbr.rel (0) target = $region29
    $region28: #{_decoder_rnn_forward_impl.1} parent=1 // pred_region
      _
    $region29: #{_decoder_rnn_forward_impl.1} parent=1 // pred_fallthru
      _
    // Predicated region
    $region30: #{_decoder_rnn_forward_impl.1} parent=1 // pred_check
      _
    $region31: #{_decoder_rnn_forward_impl.1} parent=1 // pred_check_branch
      %68 = sbr.rel (0) target = $region33
    $region32: #{_decoder_rnn_forward_impl.1} parent=1 // pred_region
      %69 = dma.done [#allocation8], 4096
    $region33: #{_decoder_rnn_forward_impl.1} parent=1 // pred_fallthru
      _
    // Predicated region
    $region34: #{_decoder_rnn_forward_impl.1} parent=1 // pred_check
      _
    $region35: #{_decoder_rnn_forward_impl.1} parent=1 // pred_check_branch
      %71 = sbr.rel (0) target = $region37
    $region36: #{_decoder_rnn_forward_impl.1} parent=1 // pred_region
      %72 = dma.done [#allocation10], 4096
    $region37: #{_decoder_rnn_forward_impl.1} parent=1 // pred_fallthru
      _
    // Predicated region
    $region38: #{_decoder_rnn_forward_impl.1} parent=1 // pred_check
      _
    $region39: #{_decoder_rnn_forward_impl.1} parent=1 // pred_check_branch
      %74 = sbr.rel (0) target = $region41
    $region40: #{_decoder_rnn_forward_impl.1} parent=1 // pred_region
      %75 = dma.done [#allocation10], 64
    $region41: #{_decoder_rnn_forward_impl.1} parent=1 // pred_fallthru
      _
    %p77 = scmp.eq.s32.totalorder 0, 0
    // Predicated region
    $region42: #{_decoder_rnn_forward_impl.1} parent=1 // pred_check
      %p78 = pneg %p77
    $region43: #{_decoder_rnn_forward_impl.1} parent=1 // pred_check_branch
      %80 = sbr.rel (%p78) target = $region45
    $region44: #{_decoder_rnn_forward_impl.1} parent=1 // pred_region
      %s81 = sld [smem:[#allocation6]]
      %s82 = smul.addr %s81, 16
      %s83 = scalar_lea.hbm %s1, %s82
      // Predicated region
      $region46: #{_decoder_rnn_forward_impl.1} parent=44 // pred_check
        _
      $region47: #{_decoder_rnn_forward_impl.1} parent=44 // pred_check_branch
        %85 = sbr.rel target = $region49
      $region48: #{_decoder_rnn_forward_impl.1} parent=44 // pred_region
        %86 = sst [smem:[#allocation14]] [#allocation13]
        %87 = sst [smem:[#allocation15]] [#allocation12]
      $region49: #{_decoder_rnn_forward_impl.1} parent=44 // pred_fallthru
        _
      %89 = shalt.err (0)
      %s91 = sshll.u32 [#allocation2], 4
      %s92 = int_to_ptr.vmem [resolvable:$true] %s91
      %94 = dma.hbm_to_vmem [thread:$0]  %s83, 16, %s92, [#allocation4]
      %s95 = sld [smem:[#allocation6 + $0x1]]
      %s96 = smul.addr %s95, 16
      %s97 = scalar_lea.hbm %s1, %s96
      %s98 = scalar_lea.vmem [#allocation2], 1
      %s99 = scalar_lea.sflag [#allocation4], 1
      // Predicated region
      $region50: #{_decoder_rnn_forward_impl.1} parent=44 // pred_check
        _
      $region51: #{_decoder_rnn_forward_impl.1} parent=44 // pred_check_branch
        %101 = sbr.rel target = $region53
      $region52: #{_decoder_rnn_forward_impl.1} parent=44 // pred_region
        %102 = sst [smem:[#allocation14]] [#allocation17]
        %103 = sst [smem:[#allocation15]] [#allocation16]
      $region53: #{_decoder_rnn_forward_impl.1} parent=44 // pred_fallthru
        _
      %105 = shalt.err (0)
      %s107 = sshll.u32 %s98, 4
      %s108 = int_to_ptr.vmem [resolvable:$true] %s107
      %110 = dma.hbm_to_vmem [thread:$0]  %s97, 16, %s108, %s99
      %s111 = sld [smem:[#allocation6 + $0x2]]
      %s112 = smul.addr %s111, 16
      %s113 = scalar_lea.hbm %s1, %s112
      %s114 = scalar_lea.vmem [#allocation2], 2
      %s115 = scalar_lea.sflag [#allocation4], 2
      // Predicated region
      $region54: #{_decoder_rnn_forward_impl.1} parent=44 // pred_check
        _
      $region55: #{_decoder_rnn_forward_impl.1} parent=44 // pred_check_branch
        %117 = sbr.rel target = $region57
      $region56: #{_decoder_rnn_forward_impl.1} parent=44 // pred_region
        %118 = sst [smem:[#allocation14]] [#allocation19]
        %119 = sst [smem:[#allocation15]] [#allocation18]
      $region57: #{_decoder_rnn_forward_impl.1} parent=44 // pred_fallthru
        _
      %121 = shalt.err (0)
      %s123 = sshll.u32 %s114, 4
      %s124 = int_to_ptr.vmem [resolvable:$true] %s123
      %126 = dma.hbm_to_vmem [thread:$0]  %s113, 16, %s124, %s115
      %s127 = sld [smem:[#allocation6 + $0x3]]
      %s128 = smul.addr %s127, 16
      %s129 = scalar_lea.hbm %s1, %s128
      %s130 = scalar_lea.vmem [#allocation2], 3
      %s131 = scalar_lea.sflag [#allocation4], 3
      // Predicated region
      $region58: #{_decoder_rnn_forward_impl.1} parent=44 // pred_check
        _
      $region59: #{_decoder_rnn_forward_impl.1} parent=44 // pred_check_branch
        %133 = sbr.rel target = $region61
      $region60: #{_decoder_rnn_forward_impl.1} parent=44 // pred_region
        %134 = sst [smem:[#allocation14]] [#allocation21]
        %135 = sst [smem:[#allocation15]] [#allocation20]
      $region61: #{_decoder_rnn_forward_impl.1} parent=44 // pred_fallthru
        _
      %137 = shalt.err (0)
      %s139 = sshll.u32 %s130, 4
      %s140 = int_to_ptr.vmem [resolvable:$true] %s139
      %142 = dma.hbm_to_vmem [thread:$0]  %s129, 16, %s140, %s131
      %s143 = sld [smem:[#allocation6 + $0x4]]
      %s144 = smul.addr %s143, 16
      %s145 = scalar_lea.hbm %s1, %s144
      %s146 = scalar_lea.vmem [#allocation2], 4
      %s147 = scalar_lea.sflag [#allocation4], 4
      // Predicated region
      $region62: #{_decoder_rnn_forward_impl.1} parent=44 // pred_check
        _
      $region63: #{_decoder_rnn_forward_impl.1} parent=44 // pred_check_branch
        %149 = sbr.rel target = $region65
      $region64: #{_decoder_rnn_forward_impl.1} parent=44 // pred_region
        %150 = sst [smem:[#allocation14]] [#allocation23]
        %151 = sst [smem:[#allocation15]] [#allocation22]
      $region65: #{_decoder_rnn_forward_impl.1} parent=44 // pred_fallthru
        _
      %153 = shalt.err (0)
      %s155 = sshll.u32 %s146, 4
      %s156 = int_to_ptr.vmem [resolvable:$true] %s155
      %158 = dma.hbm_to_vmem [thread:$0]  %s145, 16, %s156, %s147
      %s159 = sld [smem:[#allocation6 + $0x5]]
      %s160 = smul.addr %s159, 16
      %s161 = scalar_lea.hbm %s1, %s160
      %s162 = scalar_lea.vmem [#allocation2], 5
      %s163 = scalar_lea.sflag [#allocation4], 5
      // Predicated region
      $region66: #{_decoder_rnn_forward_impl.1} parent=44 // pred_check
        _
      $region67: #{_decoder_rnn_forward_impl.1} parent=44 // pred_check_branch
        %165 = sbr.rel target = $region69
      $region68: #{_decoder_rnn_forward_impl.1} parent=44 // pred_region
        %166 = sst [smem:[#allocation14]] [#allocation25]
        %167 = sst [smem:[#allocation15]] [#allocation24]
      $region69: #{_decoder_rnn_forward_impl.1} parent=44 // pred_fallthru
        _
      %169 = shalt.err (0)
      %s171 = sshll.u32 %s162, 4
      %s172 = int_to_ptr.vmem [resolvable:$true] %s171
      %174 = dma.hbm_to_vmem [thread:$0]  %s161, 16, %s172, %s163
      %s175 = sld [smem:[#allocation6 + $0x6]]
      %s176 = smul.addr %s175, 16
      %s177 = scalar_lea.hbm %s1, %s176
      %s178 = scalar_lea.vmem [#allocation2], 6
      %s179 = scalar_lea.sflag [#allocation4], 6
      // Predicated region
      $region70: #{_decoder_rnn_forward_impl.1} parent=44 // pred_check
        _
      $region71: #{_decoder_rnn_forward_impl.1} parent=44 // pred_check_branch
        %181 = sbr.rel target = $region73
      $region72: #{_decoder_rnn_forward_impl.1} parent=44 // pred_region
        %182 = sst [smem:[#allocation14]] [#allocation27]
        %183 = sst [smem:[#allocation15]] [#allocation26]
      $region73: #{_decoder_rnn_forward_impl.1} parent=44 // pred_fallthru
        _
      %185 = shalt.err (0)
      %s187 = sshll.u32 %s178, 4
      %s188 = int_to_ptr.vmem [resolvable:$true] %s187
      %190 = dma.hbm_to_vmem [thread:$0]  %s177, 16, %s188, %s179
      %s191 = sld [smem:[#allocation6 + $0x7]]
      %s192 = smul.addr %s191, 16
      %s193 = scalar_lea.hbm %s1, %s192
      %s194 = scalar_lea.vmem [#allocation2], 7
      %s195 = scalar_lea.sflag [#allocation4], 7
      // Predicated region
      $region74: #{_decoder_rnn_forward_impl.1} parent=44 // pred_check
        _
      $region75: #{_decoder_rnn_forward_impl.1} parent=44 // pred_check_branch
        %197 = sbr.rel target = $region77
      $region76: #{_decoder_rnn_forward_impl.1} parent=44 // pred_region
        %198 = sst [smem:[#allocation14]] [#allocation29]
        %199 = sst [smem:[#allocation15]] [#allocation28]
      $region77: #{_decoder_rnn_forward_impl.1} parent=44 // pred_fallthru
        _
      %201 = shalt.err (0)
      %s203 = sshll.u32 %s194, 4
      %s204 = int_to_ptr.vmem [resolvable:$true] %s203
      %206 = dma.hbm_to_vmem [thread:$0]  %s193, 16, %s204, %s195
      %s207 = smul.u32 1, 1
      %s208 = sshll.u32 %s207, 4
      %209 = dma.done [#allocation4], %s208
      %s210 = sshll.u32 %s207, 4
      %211 = dma.done %s99, %s210
      %s212 = sshll.u32 %s207, 4
      %213 = dma.done %s115, %s212
      %s214 = sshll.u32 %s207, 4
      %215 = dma.done %s131, %s214
      %s216 = sshll.u32 %s207, 4
      %217 = dma.done %s147, %s216
      %s218 = sshll.u32 %s207, 4
      %219 = dma.done %s163, %s218
      %s220 = sshll.u32 %s207, 4
      %221 = dma.done %s179, %s220
      %s222 = sshll.u32 %s207, 4
      %223 = dma.done %s195, %s222
      %v224 = vld [vmem:[#allocation2] sm:$0xff]
      %v225 = vpack.c.bf16 %v224, %v224
      %v226 = vld [vmem:[%s2] sm:$0xff]
      %v227 = vld [vmem:[%s3] sm:$0xff]
      %v228 = vld [vmem:[#allocation7] sm:$0xff]
      %v229 = vld [vmem:[#allocation7 + $0x8] sm:$0xff]
      %v230 = vld [vmem:[#allocation7 + $0x10] sm:$0xff]
      %v231 = vld [vmem:[#allocation7 + $0x18] sm:$0xff]
      %v232 = vld [vmem:[#allocation7 + $0x20] sm:$0xff]
      %v233 = vld [vmem:[#allocation7 + $0x28] sm:$0xff]
      %v234 = vld [vmem:[#allocation7 + $0x30] sm:$0xff]
      %v235 = vld [vmem:[#allocation7 + $0x38] sm:$0xff]
      %v236 = vld [vmem:[#allocation7 + $0x40] sm:$0xff]
      %v237 = vld [vmem:[#allocation7 + $0x48] sm:$0xff]
      %v238 = vld [vmem:[#allocation7 + $0x50] sm:$0xff]
      %v239 = vld [vmem:[#allocation7 + $0x58] sm:$0xff]
      %v240 = vld [vmem:[#allocation7 + $0x60] sm:$0xff]
      %v241 = vld [vmem:[#allocation7 + $0x68] sm:$0xff]
      %v242 = vld [vmem:[#allocation7 + $0x70] sm:$0xff]
      %v243 = vld [vmem:[#allocation7 + $0x78] sm:$0xff]
      %v244 = vld [vmem:[#allocation7 + $0x80] sm:$0xff]
      %v245 = vld [vmem:[#allocation7 + $0x88] sm:$0xff]
      %v246 = vld [vmem:[#allocation7 + $0x90] sm:$0xff]
      %v247 = vld [vmem:[#allocation7 + $0x98] sm:$0xff]
      %v248 = vld [vmem:[#allocation7 + $0xa0] sm:$0xff]
      %v249 = vld [vmem:[#allocation7 + $0xa8] sm:$0xff]
      %v250 = vld [vmem:[#allocation7 + $0xb0] sm:$0xff]
      %v251 = vld [vmem:[#allocation7 + $0xb8] sm:$0xff]
      %v252 = vld [vmem:[#allocation7 + $0xc0] sm:$0xff]
      %v253 = vld [vmem:[#allocation7 + $0xc8] sm:$0xff]
      %v254 = vld [vmem:[#allocation7 + $0xd0] sm:$0xff]
      %v255 = vld [vmem:[#allocation7 + $0xd8] sm:$0xff]
      %v256 = vld [vmem:[#allocation7 + $0xe0] sm:$0xff]
      %v257 = vld [vmem:[#allocation7 + $0xe8] sm:$0xff]
      %v258 = vld [vmem:[#allocation7 + $0xf0] sm:$0xff]
      %v259 = vld [vmem:[#allocation7 + $0xf8] sm:$0xff]
      %v260 = vpack.c.bf16 %v226, %v226
      %v261 = vld [vmem:[#allocation9] sm:$0xff]
      %v262 = vld [vmem:[#allocation9 + $0x8] sm:$0xff]
      %v263 = vld [vmem:[#allocation9 + $0x10] sm:$0xff]
      %v264 = vld [vmem:[#allocation9 + $0x18] sm:$0xff]
      %v265 = vld [vmem:[#allocation9 + $0x20] sm:$0xff]
      %v266 = vld [vmem:[#allocation9 + $0x28] sm:$0xff]
      %v267 = vld [vmem:[#allocation9 + $0x30] sm:$0xff]
      %v268 = vld [vmem:[#allocation9 + $0x38] sm:$0xff]
      %v269 = vld [vmem:[#allocation9 + $0x40] sm:$0xff]
      %v270 = vld [vmem:[#allocation9 + $0x48] sm:$0xff]
      %v271 = vld [vmem:[#allocation9 + $0x50] sm:$0xff]
      %v272 = vld [vmem:[#allocation9 + $0x58] sm:$0xff]
      %v273 = vld [vmem:[#allocation9 + $0x60] sm:$0xff]
      %v274 = vld [vmem:[#allocation9 + $0x68] sm:$0xff]
      %v275 = vld [vmem:[#allocation9 + $0x70] sm:$0xff]
      %v276 = vld [vmem:[#allocation9 + $0x78] sm:$0xff]
      %v277 = vld [vmem:[#allocation9 + $0x80] sm:$0xff]
      %v278 = vld [vmem:[#allocation9 + $0x88] sm:$0xff]
      %v279 = vld [vmem:[#allocation9 + $0x90] sm:$0xff]
      %v280 = vld [vmem:[#allocation9 + $0x98] sm:$0xff]
      %v281 = vld [vmem:[#allocation9 + $0xa0] sm:$0xff]
      %v282 = vld [vmem:[#allocation9 + $0xa8] sm:$0xff]
      %v283 = vld [vmem:[#allocation9 + $0xb0] sm:$0xff]
      %v284 = vld [vmem:[#allocation9 + $0xb8] sm:$0xff]
      %v285 = vld [vmem:[#allocation9 + $0xc0] sm:$0xff]
      %v286 = vld [vmem:[#allocation9 + $0xc8] sm:$0xff]
      %v287 = vld [vmem:[#allocation9 + $0xd0] sm:$0xff]
      %v288 = vld [vmem:[#allocation9 + $0xd8] sm:$0xff]
      %v289 = vld [vmem:[#allocation9 + $0xe0] sm:$0xff]
      %v290 = vld [vmem:[#allocation9 + $0xe8] sm:$0xff]
      %v291 = vld [vmem:[#allocation9 + $0xf0] sm:$0xff]
      %v292 = vld [vmem:[#allocation9 + $0xf8] sm:$0xff]
      %v325 = vunpack.c.l.b16 %v261
      %v326 = vunpack.c.h.b16 %v261
      %v327 = vunpack.c.l.b16 %v262
      %v328 = vunpack.c.h.b16 %v262
      %v329 = vunpack.c.l.b16 %v263
      %v330 = vunpack.c.h.b16 %v263
      %v331 = vunpack.c.l.b16 %v264
      %v332 = vunpack.c.h.b16 %v264
      %v333 = vunpack.c.l.b16 %v265
      %v334 = vunpack.c.h.b16 %v265
      %v335 = vunpack.c.l.b16 %v266
      %v336 = vunpack.c.h.b16 %v266
      %v337 = vunpack.c.l.b16 %v267
      %v338 = vunpack.c.h.b16 %v267
      %v339 = vunpack.c.l.b16 %v268
      %v340 = vunpack.c.h.b16 %v268
      %v341 = vunpack.c.l.b16 %v269
      %v342 = vunpack.c.h.b16 %v269
      %v343 = vunpack.c.l.b16 %v270
      %v344 = vunpack.c.h.b16 %v270
      %v345 = vunpack.c.l.b16 %v271
      %v346 = vunpack.c.h.b16 %v271
      %v347 = vunpack.c.l.b16 %v272
      %v348 = vunpack.c.h.b16 %v272
      %v349 = vunpack.c.l.b16 %v273
      %v350 = vunpack.c.h.b16 %v273
      %v351 = vunpack.c.l.b16 %v274
      %v352 = vunpack.c.h.b16 %v274
      %v353 = vunpack.c.l.b16 %v275
      %v354 = vunpack.c.h.b16 %v275
      %v355 = vunpack.c.l.b16 %v276
      %v356 = vunpack.c.h.b16 %v276
      %v357 = vunpack.c.l.b16 %v277
      %v358 = vunpack.c.h.b16 %v277
      %v359 = vunpack.c.l.b16 %v278
      %v360 = vunpack.c.h.b16 %v278
      %v361 = vunpack.c.l.b16 %v279
      %v362 = vunpack.c.h.b16 %v279
      %v363 = vunpack.c.l.b16 %v280
      %v364 = vunpack.c.h.b16 %v280
      %v365 = vunpack.c.l.b16 %v281
      %v366 = vunpack.c.h.b16 %v281
      %v367 = vunpack.c.l.b16 %v282
      %v368 = vunpack.c.h.b16 %v282
      %v369 = vunpack.c.l.b16 %v283
      %v370 = vunpack.c.h.b16 %v283
      %v371 = vunpack.c.l.b16 %v284
      %v372 = vunpack.c.h.b16 %v284
      %v373 = vunpack.c.l.b16 %v285
      %v374 = vunpack.c.h.b16 %v285
      %v375 = vunpack.c.l.b16 %v286
      %v376 = vunpack.c.h.b16 %v286
      %v377 = vunpack.c.l.b16 %v287
      %v378 = vunpack.c.h.b16 %v287
      %v379 = vunpack.c.l.b16 %v288
      %v380 = vunpack.c.h.b16 %v288
      %v381 = vunpack.c.l.b16 %v289
      %v382 = vunpack.c.h.b16 %v289
      %v383 = vunpack.c.l.b16 %v290
      %v384 = vunpack.c.h.b16 %v290
      %v385 = vunpack.c.l.b16 %v291
      %v386 = vunpack.c.h.b16 %v291
      %v387 = vunpack.c.l.b16 %v292
      %v388 = vunpack.c.h.b16 %v292
      %v389 = vpack.c.b16 %v329, %v325
      %v390 = vpack.c.b16 %v330, %v326
      %v391 = vpack.c.b16 %v331, %v327
      %v392 = vpack.c.b16 %v332, %v328
      %v393 = vpack.c.b16 %v337, %v333
      %v394 = vpack.c.b16 %v338, %v334
      %v395 = vpack.c.b16 %v339, %v335
      %v396 = vpack.c.b16 %v340, %v336
      %v397 = vpack.c.b16 %v345, %v341
      %v398 = vpack.c.b16 %v346, %v342
      %v399 = vpack.c.b16 %v347, %v343
      %v400 = vpack.c.b16 %v348, %v344
      %v401 = vpack.c.b16 %v353, %v349
      %v402 = vpack.c.b16 %v354, %v350
      %v403 = vpack.c.b16 %v355, %v351
      %v404 = vpack.c.b16 %v356, %v352
      %v405 = vpack.c.b16 %v361, %v357
      %v406 = vpack.c.b16 %v362, %v358
      %v407 = vpack.c.b16 %v363, %v359
      %v408 = vpack.c.b16 %v364, %v360
      %v409 = vpack.c.b16 %v369, %v365
      %v410 = vpack.c.b16 %v370, %v366
      %v411 = vpack.c.b16 %v371, %v367
      %v412 = vpack.c.b16 %v372, %v368
      %v413 = vpack.c.b16 %v377, %v373
      %v414 = vpack.c.b16 %v378, %v374
      %v415 = vpack.c.b16 %v379, %v375
      %v416 = vpack.c.b16 %v380, %v376
      %v417 = vpack.c.b16 %v385, %v381
      %v418 = vpack.c.b16 %v386, %v382
      %v419 = vpack.c.b16 %v387, %v383
      %v420 = vpack.c.b16 %v388, %v384
      %453 = vmatprep.subr.bf16.mxu0 %v390
      %454 = vmatpush1.bf16.msra.mxu0 %v389
      %455 = vmatprep.subr.bf16.mxu0 %v394
      %456 = vmatpush1.bf16.msra.mxu0 %v393
      %457 = vmatprep.subr.bf16.mxu0 %v398
      %458 = vmatpush1.bf16.msra.mxu0 %v397
      %459 = vmatprep.subr.bf16.mxu0 %v402
      %460 = vmatpush1.bf16.msra.mxu0 %v401
      %461 = vmatprep.subr.bf16.mxu0 %v406
      %462 = vmatpush1.bf16.msra.mxu0 %v405
      %463 = vmatprep.subr.bf16.mxu0 %v410
      %464 = vmatpush1.bf16.msra.mxu0 %v409
      %465 = vmatprep.subr.bf16.mxu0 %v414
      %466 = vmatpush1.bf16.msra.mxu0 %v413
      %467 = vmatprep.subr.bf16.mxu0 %v418
      %468 = vmatpush1.bf16.msra.mxu0 %v417
      %469 = vmatprep.subr.bf16.mxu0 0
      %470 = vmatpush1.bf16.msra.mxu0 0
      %471 = vmatprep.subr.bf16.mxu0 0
      %472 = vmatpush1.bf16.msra.mxu0 0
      %473 = vmatprep.subr.bf16.mxu0 0
      %474 = vmatpush1.bf16.msra.mxu0 0
      %475 = vmatprep.subr.bf16.mxu0 0
      %476 = vmatpush1.bf16.msra.mxu0 0
      %477 = vmatprep.subr.bf16.mxu0 0
      %478 = vmatpush1.bf16.msra.mxu0 0
      %479 = vmatprep.subr.bf16.mxu0 0
      %480 = vmatpush1.bf16.msra.mxu0 0
      %481 = vmatprep.subr.bf16.mxu0 0
      %482 = vmatpush1.bf16.msra.mxu0 0
      %483 = vmatprep.subr.bf16.mxu0 0
      %484 = vmatpush1.bf16.msra.mxu0 0
      %485 = vmatprep.mubr.bf16.mxu0 0
      %486 = vmatmul.mubr.bf16.gmra.mrb[0].mxu0 %v260
      %v487 = vpop.f32.mrb[0].mxu0
      %v488 = vadd.f32 0.0, %v487
      %v489 = vpop.f32.mrb[0].mxu0
      %v490 = vadd.f32 0.0, %v489
      %v491 = vpop.f32.mrb[0].mxu0
      %v492 = vpop.f32.mrb[0].mxu0
      %493 = vdwg.mxu0
      %494 = vmatprep.subr.bf16.mxu0 %v392
      %495 = vmatpush1.bf16.msra.mxu0 %v391
      %496 = vmatprep.subr.bf16.mxu0 %v396
      %497 = vmatpush1.bf16.msra.mxu0 %v395
      %498 = vmatprep.subr.bf16.mxu0 %v400
      %499 = vmatpush1.bf16.msra.mxu0 %v399
      %500 = vmatprep.subr.bf16.mxu0 %v404
      %501 = vmatpush1.bf16.msra.mxu0 %v403
      %502 = vmatprep.subr.bf16.mxu0 %v408
      %503 = vmatpush1.bf16.msra.mxu0 %v407
      %504 = vmatprep.subr.bf16.mxu0 %v412
      %505 = vmatpush1.bf16.msra.mxu0 %v411
      %506 = vmatprep.subr.bf16.mxu0 %v416
      %507 = vmatpush1.bf16.msra.mxu0 %v415
      %508 = vmatprep.subr.bf16.mxu0 %v420
      %509 = vmatpush1.bf16.msra.mxu0 %v419
      %510 = vmatprep.subr.bf16.mxu0 0
      %511 = vmatpush1.bf16.msra.mxu0 0
      %512 = vmatprep.subr.bf16.mxu0 0
      %513 = vmatpush1.bf16.msra.mxu0 0
      %514 = vmatprep.subr.bf16.mxu0 0
      %515 = vmatpush1.bf16.msra.mxu0 0
      %516 = vmatprep.subr.bf16.mxu0 0
      %517 = vmatpush1.bf16.msra.mxu0 0
      %518 = vmatprep.subr.bf16.mxu0 0
      %519 = vmatpush1.bf16.msra.mxu0 0
      %520 = vmatprep.subr.bf16.mxu0 0
      %521 = vmatpush1.bf16.msra.mxu0 0
      %522 = vmatprep.subr.bf16.mxu0 0
      %523 = vmatpush1.bf16.msra.mxu0 0
      %524 = vmatprep.subr.bf16.mxu0 0
      %525 = vmatpush1.bf16.msra.mxu0 0
      %526 = vmatprep.mubr.bf16.mxu0 0
      %527 = vmatmul.mubr.bf16.gmra.mrb[0].mxu0 %v260
      %v528 = vpop.f32.mrb[0].mxu0
      %v529 = vadd.f32 0.0, %v528
      %v530 = vpop.f32.mrb[0].mxu0
      %v531 = vadd.f32 0.0, %v530
      %v532 = vpop.f32.mrb[0].mxu0
      %v533 = vpop.f32.mrb[0].mxu0
      %534 = vdwg.mxu0
      %v567 = vunpack.c.l.b16 %v228
      %v568 = vunpack.c.h.b16 %v228
      %v569 = vunpack.c.l.b16 %v229
      %v570 = vunpack.c.h.b16 %v229
      %v571 = vunpack.c.l.b16 %v230
      %v572 = vunpack.c.h.b16 %v230
      %v573 = vunpack.c.l.b16 %v231
      %v574 = vunpack.c.h.b16 %v231
      %v575 = vunpack.c.l.b16 %v232
      %v576 = vunpack.c.h.b16 %v232
      %v577 = vunpack.c.l.b16 %v233
      %v578 = vunpack.c.h.b16 %v233
      %v579 = vunpack.c.l.b16 %v234
      %v580 = vunpack.c.h.b16 %v234
      %v581 = vunpack.c.l.b16 %v235
      %v582 = vunpack.c.h.b16 %v235
      %v583 = vunpack.c.l.b16 %v236
      %v584 = vunpack.c.h.b16 %v236
      %v585 = vunpack.c.l.b16 %v237
      %v586 = vunpack.c.h.b16 %v237
      %v587 = vunpack.c.l.b16 %v238
      %v588 = vunpack.c.h.b16 %v238
      %v589 = vunpack.c.l.b16 %v239
      %v590 = vunpack.c.h.b16 %v239
      %v591 = vunpack.c.l.b16 %v240
      %v592 = vunpack.c.h.b16 %v240
      %v593 = vunpack.c.l.b16 %v241
      %v594 = vunpack.c.h.b16 %v241
      %v595 = vunpack.c.l.b16 %v242
      %v596 = vunpack.c.h.b16 %v242
      %v597 = vunpack.c.l.b16 %v243
      %v598 = vunpack.c.h.b16 %v243
      %v599 = vunpack.c.l.b16 %v244
      %v600 = vunpack.c.h.b16 %v244
      %v601 = vunpack.c.l.b16 %v245
      %v602 = vunpack.c.h.b16 %v245
      %v603 = vunpack.c.l.b16 %v246
      %v604 = vunpack.c.h.b16 %v246
      %v605 = vunpack.c.l.b16 %v247
      %v606 = vunpack.c.h.b16 %v247
      %v607 = vunpack.c.l.b16 %v248
      %v608 = vunpack.c.h.b16 %v248
      %v609 = vunpack.c.l.b16 %v249
      %v610 = vunpack.c.h.b16 %v249
      %v611 = vunpack.c.l.b16 %v250
      %v612 = vunpack.c.h.b16 %v250
      %v613 = vunpack.c.l.b16 %v251
      %v614 = vunpack.c.h.b16 %v251
      %v615 = vunpack.c.l.b16 %v252
      %v616 = vunpack.c.h.b16 %v252
      %v617 = vunpack.c.l.b16 %v253
      %v618 = vunpack.c.h.b16 %v253
      %v619 = vunpack.c.l.b16 %v254
      %v620 = vunpack.c.h.b16 %v254
      %v621 = vunpack.c.l.b16 %v255
      %v622 = vunpack.c.h.b16 %v255
      %v623 = vunpack.c.l.b16 %v256
      %v624 = vunpack.c.h.b16 %v256
      %v625 = vunpack.c.l.b16 %v257
      %v626 = vunpack.c.h.b16 %v257
      %v627 = vunpack.c.l.b16 %v258
      %v628 = vunpack.c.h.b16 %v258
      %v629 = vunpack.c.l.b16 %v259
      %v630 = vunpack.c.h.b16 %v259
      %v631 = vpack.c.b16 %v571, %v567
      %v632 = vpack.c.b16 %v572, %v568
      %v633 = vpack.c.b16 %v573, %v569
      %v634 = vpack.c.b16 %v574, %v570
      %v635 = vpack.c.b16 %v579, %v575
      %v636 = vpack.c.b16 %v580, %v576
      %v637 = vpack.c.b16 %v581, %v577
      %v638 = vpack.c.b16 %v582, %v578
      %v639 = vpack.c.b16 %v587, %v583
      %v640 = vpack.c.b16 %v588, %v584
      %v641 = vpack.c.b16 %v589, %v585
      %v642 = vpack.c.b16 %v590, %v586
      %v643 = vpack.c.b16 %v595, %v591
      %v644 = vpack.c.b16 %v596, %v592
      %v645 = vpack.c.b16 %v597, %v593
      %v646 = vpack.c.b16 %v598, %v594
      %v647 = vpack.c.b16 %v603, %v599
      %v648 = vpack.c.b16 %v604, %v600
      %v649 = vpack.c.b16 %v605, %v601
      %v650 = vpack.c.b16 %v606, %v602
      %v651 = vpack.c.b16 %v611, %v607
      %v652 = vpack.c.b16 %v612, %v608
      %v653 = vpack.c.b16 %v613, %v609
      %v654 = vpack.c.b16 %v614, %v610
      %v655 = vpack.c.b16 %v619, %v615
      %v656 = vpack.c.b16 %v620, %v616
      %v657 = vpack.c.b16 %v621, %v617
      %v658 = vpack.c.b16 %v622, %v618
      %v659 = vpack.c.b16 %v627, %v623
      %v660 = vpack.c.b16 %v628, %v624
      %v661 = vpack.c.b16 %v629, %v625
      %v662 = vpack.c.b16 %v630, %v626
      %695 = vmatprep.subr.bf16.mxu0 %v632
      %696 = vmatpush1.bf16.msra.mxu0 %v631
      %697 = vmatprep.subr.bf16.mxu0 %v636
      %698 = vmatpush1.bf16.msra.mxu0 %v635
      %699 = vmatprep.subr.bf16.mxu0 %v640
      %700 = vmatpush1.bf16.msra.mxu0 %v639
      %701 = vmatprep.subr.bf16.mxu0 %v644
      %702 = vmatpush1.bf16.msra.mxu0 %v643
      %703 = vmatprep.subr.bf16.mxu0 %v648
      %704 = vmatpush1.bf16.msra.mxu0 %v647
      %705 = vmatprep.subr.bf16.mxu0 %v652
      %706 = vmatpush1.bf16.msra.mxu0 %v651
      %707 = vmatprep.subr.bf16.mxu0 %v656
      %708 = vmatpush1.bf16.msra.mxu0 %v655
      %709 = vmatprep.subr.bf16.mxu0 %v660
      %710 = vmatpush1.bf16.msra.mxu0 %v659
      %711 = vmatprep.subr.bf16.mxu0 0
      %712 = vmatpush1.bf16.msra.mxu0 0
      %713 = vmatprep.subr.bf16.mxu0 0
      %714 = vmatpush1.bf16.msra.mxu0 0
      %715 = vmatprep.subr.bf16.mxu0 0
      %716 = vmatpush1.bf16.msra.mxu0 0
      %717 = vmatprep.subr.bf16.mxu0 0
      %718 = vmatpush1.bf16.msra.mxu0 0
      %719 = vmatprep.subr.bf16.mxu0 0
      %720 = vmatpush1.bf16.msra.mxu0 0
      %721 = vmatprep.subr.bf16.mxu0 0
      %722 = vmatpush1.bf16.msra.mxu0 0
      %723 = vmatprep.subr.bf16.mxu0 0
      %724 = vmatpush1.bf16.msra.mxu0 0
      %725 = vmatprep.subr.bf16.mxu0 0
      %726 = vmatpush1.bf16.msra.mxu0 0
      %727 = vmatprep.mubr.bf16.mxu0 0
      %728 = vmatmul.mubr.bf16.gmra.mrb[0].mxu0 %v225
      %v729 = vpop.f32.mrb[0].mxu0
      %v730 = vadd.f32 %v488, %v729
      %v731 = vpop.f32.mrb[0].mxu0
      %v732 = vadd.f32 %v490, %v731
      %v733 = vpop.f32.mrb[0].mxu0
      %v734 = vpop.f32.mrb[0].mxu0
      %735 = vdwg.mxu0
      %736 = vmatprep.subr.bf16.mxu0 %v634
      %737 = vmatpush1.bf16.msra.mxu0 %v633
      %738 = vmatprep.subr.bf16.mxu0 %v638
      %739 = vmatpush1.bf16.msra.mxu0 %v637
      %740 = vmatprep.subr.bf16.mxu0 %v642
      %741 = vmatpush1.bf16.msra.mxu0 %v641
      %742 = vmatprep.subr.bf16.mxu0 %v646
      %743 = vmatpush1.bf16.msra.mxu0 %v645
      %744 = vmatprep.subr.bf16.mxu0 %v650
      %745 = vmatpush1.bf16.msra.mxu0 %v649
      %746 = vmatprep.subr.bf16.mxu0 %v654
      %747 = vmatpush1.bf16.msra.mxu0 %v653
      %748 = vmatprep.subr.bf16.mxu0 %v658
      %749 = vmatpush1.bf16.msra.mxu0 %v657
      %750 = vmatprep.subr.bf16.mxu0 %v662
      %751 = vmatpush1.bf16.msra.mxu0 %v661
      %752 = vmatprep.subr.bf16.mxu0 0
      %753 = vmatpush1.bf16.msra.mxu0 0
      %754 = vmatprep.subr.bf16.mxu0 0
      %755 = vmatpush1.bf16.msra.mxu0 0
      %756 = vmatprep.subr.bf16.mxu0 0
      %757 = vmatpush1.bf16.msra.mxu0 0
      %758 = vmatprep.subr.bf16.mxu0 0
      %759 = vmatpush1.bf16.msra.mxu0 0
      %760 = vmatprep.subr.bf16.mxu0 0
      %761 = vmatpush1.bf16.msra.mxu0 0
      %762 = vmatprep.subr.bf16.mxu0 0
      %763 = vmatpush1.bf16.msra.mxu0 0
      %764 = vmatprep.subr.bf16.mxu0 0
      %765 = vmatpush1.bf16.msra.mxu0 0
      %766 = vmatprep.subr.bf16.mxu0 0
      %767 = vmatpush1.bf16.msra.mxu0 0
      %768 = vmatprep.mubr.bf16.mxu0 0
      %769 = vmatmul.mubr.bf16.gmra.mrb[0].mxu0 %v225
      %v770 = vpop.f32.mrb[0].mxu0
      %v771 = vadd.f32 %v529, %v770
      %v772 = vpop.f32.mrb[0].mxu0
      %v773 = vadd.f32 %v531, %v772
      %v774 = vpop.f32.mrb[0].mxu0
      %v775 = vpop.f32.mrb[0].mxu0
      %776 = vdwg.mxu0
      %v777 = vld [vmem:[#allocation11] sm:$0xf]
      %v779 = vlaneseq
      %v780 = vshrl.u32 %v779, 7
      %v781 = vsub.s32 0, %v780
      %v782 = vrot.slane %v777, %v781
      %v783 = vlaneseq
      %v784 = vshrl.u32 %v783, 7
      %v785 = vsub.s32 1, %v784
      %v786 = vrot.slane %v777, %v785
      %v787 = vlaneseq
      %v788 = vshrl.u32 %v787, 7
      %v789 = vsub.s32 2, %v788
      %v790 = vrot.slane %v777, %v789
      %v791 = vlaneseq
      %v792 = vshrl.u32 %v791, 7
      %v793 = vsub.s32 3, %v792
      %v794 = vrot.slane %v777, %v793
      %v799 = vadd.f32 %v730, %v782
      %v800 = vadd.f32 %v732, %v786
      %v801 = vadd.f32 %v771, %v790
      %v802 = vadd.f32 %v773, %v794
      %v803 = vxor.u32 %v799, 2147483648
      %v804 = vmul.f32 %v803, 1.442695
      %v805 = vpow.pop %v804
      %v806 = vadd.f32 %v805, 1.0
      %v807 = vrcp.pop %v806
      %v808 = vmul.f32 1.0, %v807
      %v809 = vxor.u32 %v800, 2147483648
      %v810 = vmul.f32 %v809, 1.442695
      %v811 = vpow.pop %v810
      %v812 = vadd.f32 %v811, 1.0
      %v813 = vrcp.pop %v812
      %v814 = vmul.f32 1.0, %v813
      %v815 = vtanh.pop %v801
      %v816 = vxor.u32 %v802, 2147483648
      %v817 = vmul.f32 %v816, 1.442695
      %v818 = vpow.pop %v817
      %v819 = vadd.f32 %v818, 1.0
      %v820 = vrcp.pop %v819
      %v821 = vmul.f32 1.0, %v820
      %v822 = vmul.f32 %v814, %v227
      %v823 = vmul.f32 %v808, %v815
      %v824 = vadd.f32 %v822, %v823
      %v825 = vtanh.pop %v824
      %v826 = vmul.f32 %v821, %v825
      %827 = vst [vmem:[%s10] sm:$0xff] %v826
      %828 = vst [vmem:[%s11] sm:$0xff] %v824
      %v829 = vpack.c.bf16 %v826, %v826
      %830 = vst [vmem:[#allocation3] sm:$0xf] %v829
    $region45: #{_decoder_rnn_forward_impl.1} parent=1 // pred_fallthru
      _
    %v831 = vld [vmem:[#allocation3] sm:$0xf]
    %v832 = vld [vmem:[%s7] sm:$0xf]
    %v833 = vld [vmem:[%s7 + $0x4] sm:$0xf]
    %v834 = vld [vmem:[%s7 + $0x8] sm:$0xf]
    %v835 = vld [vmem:[%s7 + $0xc] sm:$0xf]
    %v836 = vld [vmem:[%s7 + $0x10] sm:$0xf]
    %v837 = vld [vmem:[%s7 + $0x14] sm:$0xf]
    %v838 = vld [vmem:[%s7 + $0x18] sm:$0xf]
    %v839 = vld [vmem:[%s7 + $0x1c] sm:$0xf]
    %v840 = vld [vmem:[%s7 + $0x20] sm:$0xf]
    %v841 = vld [vmem:[%s7 + $0x24] sm:$0xf]
    %v842 = vld [vmem:[%s7 + $0x28] sm:$0xf]
    %v843 = vld [vmem:[%s7 + $0x2c] sm:$0xf]
    %v844 = vld [vmem:[%s7 + $0x30] sm:$0xf]
    %v845 = vld [vmem:[%s7 + $0x34] sm:$0xf]
    %v846 = vld [vmem:[%s7 + $0x38] sm:$0xf]
    %v847 = vld [vmem:[%s7 + $0x3c] sm:$0xf]
    %v848 = vld [vmem:[%s8] sm:$0x1]
    %v850 = vlaneseq
    %v851 = vshrl.u32 %v850, 7
    %v852 = vsub.s32 0, %v851
    %v853 = vrot.slane %v848, %v852
    %v871 = vunpack.c.l.b16 %v832
    %v872 = vunpack.c.l.b16 %v833
    %v873 = vunpack.c.l.b16 %v834
    %v874 = vunpack.c.l.b16 %v835
    %v875 = vunpack.c.l.b16 %v836
    %v876 = vunpack.c.l.b16 %v837
    %v877 = vunpack.c.l.b16 %v838
    %v878 = vunpack.c.l.b16 %v839
    %v879 = vunpack.c.l.b16 %v840
    %v880 = vunpack.c.l.b16 %v841
    %v881 = vunpack.c.l.b16 %v842
    %v882 = vunpack.c.l.b16 %v843
    %v883 = vunpack.c.l.b16 %v844
    %v884 = vunpack.c.l.b16 %v845
    %v885 = vunpack.c.l.b16 %v846
    %v886 = vunpack.c.l.b16 %v847
    %v887 = vpack.c.b16 %v872, %v871
    %v888 = vpack.c.b16 %v874, %v873
    %v889 = vpack.c.b16 %v876, %v875
    %v890 = vpack.c.b16 %v878, %v877
    %v891 = vpack.c.b16 %v880, %v879
    %v892 = vpack.c.b16 %v882, %v881
    %v893 = vpack.c.b16 %v884, %v883
    %v894 = vpack.c.b16 %v886, %v885
    %903 = vmatprep.subr.bf16.mxu0 0
    %904 = vmatpush1.bf16.msra.mxu0 %v887
    %905 = vmatprep.subr.bf16.mxu0 0
    %906 = vmatpush1.bf16.msra.mxu0 %v888
    %907 = vmatprep.subr.bf16.mxu0 0
    %908 = vmatpush1.bf16.msra.mxu0 %v889
    %909 = vmatprep.subr.bf16.mxu0 0
    %910 = vmatpush1.bf16.msra.mxu0 %v890
    %911 = vmatprep.subr.bf16.mxu0 0
    %912 = vmatpush1.bf16.msra.mxu0 %v891
    %913 = vmatprep.subr.bf16.mxu0 0
    %914 = vmatpush1.bf16.msra.mxu0 %v892
    %915 = vmatprep.subr.bf16.mxu0 0
    %916 = vmatpush1.bf16.msra.mxu0 %v893
    %917 = vmatprep.subr.bf16.mxu0 0
    %918 = vmatpush1.bf16.msra.mxu0 %v894
    %919 = vmatprep.subr.bf16.mxu0 0
    %920 = vmatpush1.bf16.msra.mxu0 0
    %921 = vmatprep.subr.bf16.mxu0 0
    %922 = vmatpush1.bf16.msra.mxu0 0
    %923 = vmatprep.subr.bf16.mxu0 0
    %924 = vmatpush1.bf16.msra.mxu0 0
    %925 = vmatprep.subr.bf16.mxu0 0
    %926 = vmatpush1.bf16.msra.mxu0 0
    %927 = vmatprep.subr.bf16.mxu0 0
    %928 = vmatpush1.bf16.msra.mxu0 0
    %929 = vmatprep.subr.bf16.mxu0 0
    %930 = vmatpush1.bf16.msra.mxu0 0
    %931 = vmatprep.subr.bf16.mxu0 0
    %932 = vmatpush1.bf16.msra.mxu0 0
    %933 = vmatprep.subr.bf16.mxu0 0
    %934 = vmatpush1.bf16.msra.mxu0 0
    %935 = vmatprep.mubr.bf16.mxu0 0
    %936 = vmatmul.mubr.bf16.gmra.mrb[0].mxu0 %v831
    %v937 = vpop.f32.mrb[0].mxu0
    %v938 = vadd.f32 %v853, %v937
    %v939 = vpop.f32.mrb[0].mxu0
    %v940 = vpop.f32.mrb[0].mxu0
    %v941 = vpop.f32.mrb[0].mxu0
    %942 = vdwg.mxu0
    %943 = vst [vmem:[%s9] sm:$0xff] %v938
    // Predicated region
    $region78: #{_decoder_rnn_forward_impl.1} parent=1 // pred_check
      _
    $region79: #{_decoder_rnn_forward_impl.1} parent=1 // pred_check_branch
      %945 = sbr.rel (0) target = $region81
    $region80: #{_decoder_rnn_forward_impl.1} parent=1 // pred_region
      _
    $region81: #{_decoder_rnn_forward_impl.1} parent=1 // pred_fallthru
      _
    // Predicated region
    $region82: #{_decoder_rnn_forward_impl.1} parent=1 // pred_check
      _
    $region83: #{_decoder_rnn_forward_impl.1} parent=1 // pred_check_branch
      %947 = sbr.rel (0) target = $region85
    $region84: #{_decoder_rnn_forward_impl.1} parent=1 // pred_region
      _
    $region85: #{_decoder_rnn_forward_impl.1} parent=1 // pred_fallthru
      _
    // Predicated region
    $region86: #{_decoder_rnn_forward_impl.1} parent=1 // pred_check
      _
    $region87: #{_decoder_rnn_forward_impl.1} parent=1 // pred_check_branch
      %949 = sbr.rel (0) target = $region89
    $region88: #{_decoder_rnn_forward_impl.1} parent=1 // pred_region
      _
    $region89: #{_decoder_rnn_forward_impl.1} parent=1 // pred_fallthru
      _
    // Predicated region
    $region90: #{_decoder_rnn_forward_impl.1} parent=1 // pred_check
      _
    $region91: #{_decoder_rnn_forward_impl.1} parent=1 // pred_check_branch
      %951 = sbr.rel (0) target = $region93
    $region92: #{_decoder_rnn_forward_impl.1} parent=1 // pred_region
      _
    $region93: #{_decoder_rnn_forward_impl.1} parent=1 // pred_fallthru
      _
    // Predicated region
    $region94: #{_decoder_rnn_forward_impl.1} parent=1 // pred_check
      _
    $region95: #{_decoder_rnn_forward_impl.1} parent=1 // pred_check_branch
      %953 = sbr.rel (0) target = $region97
    $region96: #{_decoder_rnn_forward_impl.1} parent=1 // pred_region
      _
    $region97: #{_decoder_rnn_forward_impl.1} parent=1 // pred_fallthru
      _
    // Predicated region
    $region98: #{_decoder_rnn_forward_impl.1} parent=1 // pred_check
      _
    $region99: #{_decoder_rnn_forward_impl.1} parent=1 // pred_check_branch
      %955 = sbr.rel (0) target = $region101
    $region100: #{_decoder_rnn_forward_impl.1} parent=1 // pred_region
      _
    $region101: #{_decoder_rnn_forward_impl.1} parent=1 // pred_fallthru
      _
    %956 = vsyncpa [#allocation8], 1
    %957 = vsyncpa [#allocation10], 1
  %958 = vsyncmov [#allocation4]
  %s959 = vpop.sfrf %958
  %p960 = scmp.eq.s32.totalorder %s959, 0
  %p961 = pneg %p960
  %963 = shalt.err (%p961)
  %s964 = scalar_lea.sflag [#allocation4], 1
  %965 = vsyncmov %s964
  %s966 = vpop.sfrf %965
  %p967 = scmp.eq.s32.totalorder %s966, 0
  %p968 = pneg %p967
  %970 = shalt.err (%p968)
  %s971 = scalar_lea.sflag [#allocation4], 2
  %972 = vsyncmov %s971
  %s973 = vpop.sfrf %972
  %p974 = scmp.eq.s32.totalorder %s973, 0
  %p975 = pneg %p974
  %977 = shalt.err (%p975)
  %s978 = scalar_lea.sflag [#allocation4], 3
  %979 = vsyncmov %s978
  %s980 = vpop.sfrf %979
  %p981 = scmp.eq.s32.totalorder %s980, 0
  %p982 = pneg %p981
  %984 = shalt.err (%p982)
  %s985 = scalar_lea.sflag [#allocation4], 4
  %986 = vsyncmov %s985
  %s987 = vpop.sfrf %986
  %p988 = scmp.eq.s32.totalorder %s987, 0
  %p989 = pneg %p988
  %991 = shalt.err (%p989)
  %s992 = scalar_lea.sflag [#allocation4], 5
  %993 = vsyncmov %s992
  %s994 = vpop.sfrf %993
  %p995 = scmp.eq.s32.totalorder %s994, 0
  %p996 = pneg %p995
  %998 = shalt.err (%p996)
  %s999 = scalar_lea.sflag [#allocation4], 6
  %1000 = vsyncmov %s999
  %s1001 = vpop.sfrf %1000
  %p1002 = scmp.eq.s32.totalorder %s1001, 0
  %p1003 = pneg %p1002
  %1005 = shalt.err (%p1003)
  %s1006 = scalar_lea.sflag [#allocation4], 7
  %1007 = vsyncmov %s1006
  %s1008 = vpop.sfrf %1007
  %p1009 = scmp.eq.s32.totalorder %s1008, 0
  %p1010 = pneg %p1009
  %1012 = shalt.err (%p1010)

</llo_original>
